<compile_context>
chip_gen: v7x
topology: tpu7x:2x2x1
jax: 0.10.0
libtpu: 0.0.40
codegen_flags: <defaults>
</compile_context>

<pallas_src>
import functools

import jax
import jax.numpy as jnp
import numpy as np
from jax import lax
from jax.experimental import pallas as pl
from jax.experimental.pallas import tpu as pltpu

ROUTER_NUM_UNITS = 256   # MyMultiHeadAttention num_units
ROUTER_NUM_HEADS = 4     # MyMultiHeadAttention num_heads

# Fits v7x (64 MiB physical VMEM) with headroom; raises the 16/32 MiB default scoped limit.
_VMEM_LIMIT_BYTES = 48 * 1024 * 1024


def _router_attention_kernel(hidden_size, num_heads,
                             hs_ref, mask_ref, sas_ref,
                             wq_ref, wk_ref, wv_ref, wo_ref, bo_ref,
                             new_tok_ref, imp_ref):
    """One (batch-block, query-tile) grid step of the router."""
    r = pl.program_id(1)

    # ---- importance scores: imp[b, j] = (1/H) * sum_h sum_i sas[b, h, i, j] ----
    # The i (query) axis is tiled by the reduction grid axis r and accumulated into the
    # resident output block.
    sas = sas_ref[...].astype(jnp.float32)                          # [Bb, H, tq, L]
    imp_partial = jnp.sum(sas, axis=(1, 2)) * (1.0 / sas.shape[1])  # [Bb, L]

    @pl.when(r == 0)
    def _init_importance():
        imp_ref[...] = jnp.zeros_like(imp_ref)

    imp_ref[...] += imp_partial

    # ---- router cross-attention (only once per batch block) ----
    @pl.when(r == 0)
    def _attention():
        hs = hs_ref[...].astype(jnp.float32)                        # [Bb, L, D]
        mask = mask_ref[...].astype(jnp.float32)                    # [Bb, L, 1] additive mask
        Bb, L, D = hs.shape
        U = wq_ref.shape[1]
        hd = U // num_heads

        # sentence pooling: att = softmax(mask over L); sent = att @ hidden   (VPU)
        mmax = jnp.max(mask, axis=1, keepdims=True)                 # [Bb, 1, 1]
        e = jnp.exp(mask - mmax)
        att = e * pl.reciprocal(jnp.sum(e, axis=1, keepdims=True), approx=True)
        sent = jnp.sum(att * hs, axis=1)                            # [Bb, D]

        # projections (MXU; K/V have M = Bb*L rows)
        q = jnp.dot(sent, wq_ref[...], preferred_element_type=jnp.float32)    # [Bb, U]
        hs2 = hs.reshape(Bb * L, D)
        k = jnp.dot(hs2, wk_ref[...], preferred_element_type=jnp.float32)     # [Bb*L, U]
        v = jnp.dot(hs2, wv_ref[...], preferred_element_type=jnp.float32)     # [Bb*L, U]

        # static 0/1 head selectors (replace 64-lane head slices + concat)
        u_uh = lax.broadcasted_iota(jnp.int32, (U, num_heads), 0)
        h_uh = lax.broadcasted_iota(jnp.int32, (U, num_heads), 1)
        sel_uh = ((u_uh >= h_uh * hd) & (u_uh < (h_uh + 1) * hd)).astype(jnp.float32)
        h_hu = lax.broadcasted_iota(jnp.int32, (num_heads, U), 0)
        u_hu = lax.broadcasted_iota(jnp.int32, (num_heads, U), 1)
        sel_hu = ((u_hu >= h_hu * hd) & (u_hu < (h_hu + 1) * hd)).astype(jnp.float32)

        # all-head scores: scores[b, l, h] = sum_d q[b, h*hd+d] * k[b, l, h*hd+d] / sqrt(D)
        k3 = k.reshape(Bb, L, U)
        v3 = v.reshape(Bb, L, U)
        qk = q[:, None, :] * k3                                     # [Bb, L, U]
        scores = jnp.dot(qk.reshape(Bb * L, U), sel_uh,
                         preferred_element_type=jnp.float32)        # [Bb*L, H]
        scores = scores.reshape(Bb, L, num_heads) * (1.0 / (float(hidden_size) ** 0.5))

        key_mask = mask < -10.0                                     # [Bb, L, 1]: True => masked
        scores = jnp.where(key_mask, -jnp.inf, scores)

        # softmax over keys (L = sublane axis)
        smax = jnp.max(scores, axis=1, keepdims=True)               # [Bb, 1, H]
        p = jnp.exp(scores - smax)
        p = p * pl.reciprocal(jnp.sum(p, axis=1, keepdims=True), approx=True)

        # out[b, u] = sum_l p[b, l, head(u)] * v[b, l, u]
        p_full = jnp.dot(p.reshape(Bb * L, num_heads), sel_hu,
                         preferred_element_type=jnp.float32).reshape(Bb, L, U)
        o = jnp.sum(p_full * v3, axis=1)                            # [Bb, U]

        new_tok = jnp.dot(o, wo_ref[...], preferred_element_type=jnp.float32) + bo_ref[...]
        new_tok_ref[...] = new_tok.astype(new_tok_ref.dtype)        # [Bb, D] lane-dense


def _pick_batch_block(B):
    if B <= 8:
        return B
    if B % 8 == 0:
        return 8
    return B   # TODO(synk): pad the batch to a multiple of 8 instead of one big block


def _pick_query_tile(L):
    for cand in (128, 64, 32, 16, 8):
        if L % cand == 0:
            return cand
    return L


def router_attention(hidden_states, mask3d, self_attention_scores,
                     wq, wk, wv, wo, bo, *, batch_block=None, query_tile=None):
    """hidden_states [B,L,D], mask3d additive mask [B,L,1], self_attention_scores [B,H,L,L].
    Returns (new_token [B,D], importance [B,L])."""
    B, L, D = hidden_states.shape
    H = self_attention_scores.shape[1]
    U = wq.shape[1]

    Bb = batch_block if batch_block is not None else _pick_batch_block(B)
    tq = query_tile if query_tile is not None else _pick_query_tile(L)
    assert B % Bb == 0, (B, Bb)
    assert L % tq == 0, (L, tq)

    kernel = functools.partial(_router_attention_kernel, D, ROUTER_NUM_HEADS)

    new_token, importance = pl.pallas_call(
        kernel,
        out_shape=(
            jax.ShapeDtypeStruct((B, D), jnp.float32),
            jax.ShapeDtypeStruct((B, L), jnp.float32),
        ),
        grid_spec=pltpu.PrefetchScalarGridSpec(
            num_scalar_prefetch=0,
            grid=(B // Bb, L // tq),
            in_specs=[
                pl.BlockSpec((Bb, L, D), lambda b, r: (b, 0, 0)),         # hidden_states
                pl.BlockSpec((Bb, L, 1), lambda b, r: (b, 0, 0)),         # additive mask
                pl.BlockSpec((Bb, H, tq, L), lambda b, r: (b, 0, r, 0)),  # sas query-tile
                pl.BlockSpec((D, U), lambda b, r: (0, 0)),                # Wq (constant index)
                pl.BlockSpec((D, U), lambda b, r: (0, 0)),                # Wk
                pl.BlockSpec((D, U), lambda b, r: (0, 0)),                # Wv
                pl.BlockSpec((U, D), lambda b, r: (0, 0)),                # Wo
                pl.BlockSpec((1, D), lambda b, r: (0, 0)),                # bo
            ],
            out_specs=[
                pl.BlockSpec((Bb, D), lambda b, r: (b, 0)),   # new_token (lane-dense)
                pl.BlockSpec((Bb, L), lambda b, r: (b, 0)),   # importance (accumulator)
            ],
        ),
        compiler_params=pltpu.CompilerParams(
            dimension_semantics=("parallel", "arbitrary"),
            vmem_limit_bytes=_VMEM_LIMIT_BYTES,
        ),
    )(hidden_states, mask3d, self_attention_scores, wq, wk, wv, wo, bo)
    return new_token, importance


def router_forward(hidden_states, attention_mask, self_attention_scores, params, K,
                   *, batch_block=None, query_tile=None):
    """Full Router.forward. attention_mask: [B,1,1,L]; returns (final_token, final_mask)."""
    B, L, D = hidden_states.shape
    mask2d = attention_mask[:, 0, 0, :]                            # [B, L]
    mask3d = mask2d[:, :, None]                                    # [B, L, 1]

    new_token, importance = router_attention(
        hidden_states, mask3d, self_attention_scores,
        params["wq"], params["wk"], params["wv"], params["wo"], params["bo"],
        batch_block=batch_block, query_tile=query_tile)
    new_token = new_token[:, None, :]                              # [B, 1, D]

    # Data-dependent top-K selection + gather: plain JAX glue.
    # PyTorch's boolean-mask gather returns tokens in ascending index order, so sort.
    _, idx = jax.lax.top_k(importance, K)
    idx = jnp.sort(idx, axis=-1)                                   # [B, K]
    preserved_tokens = jnp.take_along_axis(hidden_states, idx[:, :, None], axis=1)  # [B,K,D]
    preserved_mask = jnp.take_along_axis(mask2d, idx, axis=1).reshape(B, 1, 1, K)

    class_token = hidden_states[:, :1, :]                          # [B,1,D]
    zeros_mask = jnp.zeros((B, 1, 1, 1), attention_mask.dtype)

    final_token = jnp.concatenate([class_token, preserved_tokens, new_token], axis=1)
    final_mask = jnp.concatenate([zeros_mask, preserved_mask, zeros_mask], axis=-1)
    # TODO(synk): only the config.use_smaller_router=True branch (MyMultiHeadAttention)
    # is implemented; the nn.MultiheadAttention branch is not.
    return final_token, final_mask


def reference_forward(hidden_states, attention_mask, sas, params, K):
    """Pure-JAX reference mirroring the PyTorch module (for validation)."""
    B, L, D = hidden_states.shape
    nh = ROUTER_NUM_HEADS
    U = params["wq"].shape[1]
    hd = U // nh

    att = jax.nn.softmax(attention_mask, axis=-1)[:, 0, 0, :]      # [B, L]
    sentences = jnp.einsum("bl,bld->bd", att, hidden_states)[:, None, :]  # [B,1,D]
    mask2d = attention_mask[:, 0, 0, :]
    kpm = mask2d < -10.0

    q = sentences @ params["wq"]                                   # [B,1,U]
    k = hidden_states @ params["wk"]                               # [B,L,U]
    v = hidden_states @ params["wv"]
    qh = q.reshape(B, 1, nh, hd).transpose(2, 0, 1, 3)             # [h,B,1,hd]
    kh = k.reshape(B, L, nh, hd).transpose(2, 0, 1, 3)
    vh = v.reshape(B, L, nh, hd).transpose(2, 0, 1, 3)

    s = jnp.einsum("hbqd,hbkd->hbqk", qh, kh) / (float(D) ** 0.5)
    s = jnp.where(kpm[None, :, None, :], -jnp.inf, s)
    p = jax.nn.softmax(s, axis=-1)
    o = jnp.einsum("hbqk,hbkd->hbqd", p, vh)                       # [h,B,1,hd]
    o = jnp.concatenate([o[h] for h in range(nh)], axis=-1)        # [B,1,U]
    new_token = o @ params["wo"] + params["bo"]                    # [B,1,D]

    importance = sas.mean(axis=1).sum(axis=1)                      # [B, L]
    _, idx = jax.lax.top_k(importance, K)
    idx = jnp.sort(idx, axis=-1)
    preserved_tokens = jnp.take_along_axis(hidden_states, idx[:, :, None], axis=1)
    preserved_mask = jnp.take_along_axis(mask2d, idx, axis=1).reshape(B, 1, 1, K)
    class_token = hidden_states[:, :1, :]
    zeros_mask = jnp.zeros((B, 1, 1, 1), attention_mask.dtype)
    final_token = jnp.concatenate([class_token, preserved_tokens, new_token], axis=1)
    final_mask = jnp.concatenate([zeros_mask, preserved_mask, zeros_mask], axis=-1)
    return final_token, final_mask


if __name__ == "__main__":
    B, L, D, H, K = 2, 16, 32, 4, 4       # batch, seq, hidden, attn heads, preserved tokens
    U = ROUTER_NUM_UNITS

    key = jax.random.PRNGKey(0)
    ks = jax.random.split(key, 8)

    hidden_states = jax.random.normal(ks[0], (B, L, D), jnp.float32)
    # additive attention mask: 0 for valid tokens, -10000 for padding positions
    valid_lens = jnp.array([L, L - 5])
    pos = jnp.arange(L)[None, :]
    mask2d = jnp.where(pos < valid_lens[:, None], 0.0, -10000.0).astype(jnp.float32)
    attention_mask = mask2d[:, None, None, :]                      # [B,1,1,L]
    self_attention_scores = jax.random.uniform(ks[1], (B, H, L, L), jnp.float32)

    # deterministic synthetic parameters (MyMultiHeadAttention: Wq/Wk/Wv no bias, Wo with bias)
    params = dict(
        wq=0.1 * jax.random.normal(ks[2], (D, U), jnp.float32),
        wk=0.1 * jax.random.normal(ks[3], (D, U), jnp.float32),
        wv=0.1 * jax.random.normal(ks[4], (D, U), jnp.float32),
        wo=0.1 * jax.random.normal(ks[5], (U, D), jnp.float32),
        bo=0.1 * jax.random.normal(ks[6], (1, D), jnp.float32),
    )

    # query_tile=8 forces a 2-step reduction axis at L=16 so the accumulator path is exercised.
    final_token, final_mask = router_forward(
        hidden_states, attention_mask, self_attention_scores, params, K, query_tile=8)
    jax.block_until_ready((final_token, final_mask))

    ref_token, ref_mask = reference_forward(
        hidden_states, attention_mask, self_attention_scores, params, K)

    assert final_token.shape == (B, K + 2, D)
    assert final_mask.shape == (B, 1, 1, K + 2)
    # Tolerance accounts for the EUP approximate reciprocals in the two softmaxes.
    np.testing.assert_allclose(np.asarray(final_token), np.asarray(ref_token),
                               rtol=2e-2, atol=2e-2)
    np.testing.assert_allclose(np.asarray(final_mask), np.asarray(ref_mask),
                               rtol=1e-5, atol=1e-5)
    print("KERNEL_OK")
</pallas_src>

<mosaic_0001>
module attributes {stable_mosaic.version = 11 : i64} {
  func.func @_router_attention_kernel(%arg0: i32, %arg1: i32, %arg2: memref<2x16x32xf32, #tpu.memory_space<vmem>>, %arg3: memref<2x16x1xf32, #tpu.memory_space<vmem>>, %arg4: memref<2x4x8x16xf32, #tpu.memory_space<vmem>>, %arg5: memref<32x256xf32, #tpu.memory_space<vmem>>, %arg6: memref<32x256xf32, #tpu.memory_space<vmem>>, %arg7: memref<32x256xf32, #tpu.memory_space<vmem>>, %arg8: memref<256x32xf32, #tpu.memory_space<vmem>>, %arg9: memref<1x32xf32, #tpu.memory_space<vmem>>, %arg10: memref<2x32xf32, #tpu.memory_space<vmem>>, %arg11: memref<2x16xf32, #tpu.memory_space<vmem>>) attributes {dimension_semantics = [#tpu.dimension_semantics<parallel>, #tpu.dimension_semantics<arbitrary>], iteration_bounds = array<i64: 1, 2>, scalar_prefetch = 0 : i64, scratch_operands = 0 : i64, tpu.core_type = #tpu.core_type<tc>, window_params = [{transform_indices = @transform_0, window_bounds = array<i64: 2, 16, 32>}, {transform_indices = @transform_1, window_bounds = array<i64: 2, 16, 1>}, {transform_indices = @transform_2, window_bounds = array<i64: 2, 4, 8, 16>}, {pipeline_mode = #tpu.pipeline_mode<synchronous>, transform_indices = @transform_3, window_bounds = array<i64: 32, 256>}, {pipeline_mode = #tpu.pipeline_mode<synchronous>, transform_indices = @transform_4, window_bounds = array<i64: 32, 256>}, {pipeline_mode = #tpu.pipeline_mode<synchronous>, transform_indices = @transform_5, window_bounds = array<i64: 32, 256>}, {pipeline_mode = #tpu.pipeline_mode<synchronous>, transform_indices = @transform_6, window_bounds = array<i64: 256, 32>}, {pipeline_mode = #tpu.pipeline_mode<synchronous>, transform_indices = @transform_7, window_bounds = array<i64: 1, 32>}, {transform_indices = @transform_8, window_bounds = array<i64: 2, 32>}, {transform_indices = @transform_9, window_bounds = array<i64: 2, 16>}]} {
    %c0 = arith.constant 0 : index
    %c0_0 = arith.constant 0 : index
    %c0_1 = arith.constant 0 : index
    %c0_2 = arith.constant 0 : index
    %0 = vector.load %arg4[%c0, %c0_0, %c0_1, %c0_2] : memref<2x4x8x16xf32, #tpu.memory_space<vmem>>, vector<2x4x8x16xf32>
    %cst = arith.constant dense<0.000000e+00> : vector<2x16xf32>
    %1 = vector.multi_reduction <add>, %0, %cst [1, 2] : vector<2x4x8x16xf32> to vector<2x16xf32>
    %cst_3 = arith.constant 2.500000e-01 : f32
    %2 = vector.broadcast %cst_3 : f32 to vector<2x16xf32>
    %3 = arith.mulf %1, %2 : vector<2x16xf32>
    %c0_i32 = arith.constant 0 : i32
    %4 = arith.cmpi eq, %arg1, %c0_i32 : i32
    %5 = arith.extui %4 : i1 to i32
    %c0_i32_4 = arith.constant 0 : i32
    %6 = arith.cmpi ne, %5, %c0_i32_4 : i32
    scf.if %6 {
      %cst_11 = arith.constant 0.000000e+00 : f32
      %13 = vector.broadcast %cst_11 : f32 to vector<2x16xf32>
      %c0_12 = arith.constant 0 : index
      %c0_13 = arith.constant 0 : index
      %14 = vector.load %arg11[%c0_12, %c0_13] : memref<2x16xf32, #tpu.memory_space<vmem>>, vector<2x16xf32>
      tpu.vector_store %arg11[%c0_12, %c0_13], %13 {strides = array<i32>} : memref<2x16xf32, #tpu.memory_space<vmem>>, vector<2x16xf32>,
    } else {
    }
    %c0_5 = arith.constant 0 : index
    %c0_6 = arith.constant 0 : index
    %7 = vector.load %arg11[%c0_5, %c0_6] : memref<2x16xf32, #tpu.memory_space<vmem>>, vector<2x16xf32>
    %8 = arith.addf %7, %3 : vector<2x16xf32>
    %c0_7 = arith.constant 0 : index
    %c0_8 = arith.constant 0 : index
    %9 = vector.load %arg11[%c0_7, %c0_8] : memref<2x16xf32, #tpu.memory_space<vmem>>, vector<2x16xf32>
    tpu.vector_store %arg11[%c0_7, %c0_8], %8 {strides = array<i32>} : memref<2x16xf32, #tpu.memory_space<vmem>>, vector<2x16xf32>,
    %c0_i32_9 = arith.constant 0 : i32
    %10 = arith.cmpi eq, %arg1, %c0_i32_9 : i32
    %11 = arith.extui %10 : i1 to i32
    %c0_i32_10 = arith.constant 0 : i32
    %12 = arith.cmpi ne, %11, %c0_i32_10 : i32
    scf.if %12 {
      %c0_11 = arith.constant 0 : index
      %c0_12 = arith.constant 0 : index
      %c0_13 = arith.constant 0 : index
      %13 = vector.load %arg2[%c0_11, %c0_12, %c0_13] : memref<2x16x32xf32, #tpu.memory_space<vmem>>, vector<2x16x32xf32>
      %c0_14 = arith.constant 0 : index
      %c0_15 = arith.constant 0 : index
      %c0_16 = arith.constant 0 : index
      %14 = vector.load %arg3[%c0_14, %c0_15, %c0_16] : memref<2x16x1xf32, #tpu.memory_space<vmem>>, vector<2x16x1xf32>
      %cst_17 = arith.constant dense<0xFF800000> : vector<2x1xf32>
      %15 = vector.multi_reduction <maximumf>, %14, %cst_17 [1] : vector<2x16x1xf32> to vector<2x1xf32>
      %16 = vector.shape_cast %15 : vector<2x1xf32> to vector<2x1x1xf32>
      %17 = vector.broadcast %16 : vector<2x1x1xf32> to vector<2x16x1xf32>
      %18 = arith.subf %14, %17 : vector<2x16x1xf32>
      %19 = math.exp %18 : vector<2x16x1xf32>
      %cst_18 = arith.constant dense<0.000000e+00> : vector<2x1xf32>
      %20 = vector.multi_reduction <add>, %19, %cst_18 [1] : vector<2x16x1xf32> to vector<2x1xf32>
      %21 = vector.shape_cast %20 : vector<2x1xf32> to vector<2x1x1xf32>
      %22 = tpu.reciprocal %21 {approx = true} : vector<2x1x1xf32> -> vector<2x1x1xf32>
      %23 = vector.broadcast %22 : vector<2x1x1xf32> to vector<2x16x1xf32>
      %24 = arith.mulf %19, %23 : vector<2x16x1xf32>
      %25 = vector.broadcast %24 : vector<2x16x1xf32> to vector<2x16x32xf32>
      %26 = arith.mulf %25, %13 : vector<2x16x32xf32>
      %cst_19 = arith.constant dense<0.000000e+00> : vector<2x32xf32>
      %27 = vector.multi_reduction <add>, %26, %cst_19 [1] : vector<2x16x32xf32> to vector<2x32xf32>
      %c0_20 = arith.constant 0 : index
      %c0_21 = arith.constant 0 : index
      %28 = vector.load %arg5[%c0_20, %c0_21] : memref<32x256xf32, #tpu.memory_space<vmem>>, vector<32x256xf32>
      %cst_22 = arith.constant dense<0.000000e+00> : vector<2x256xf32>
      %29 = tpu.matmul %27, %28, %cst_22 {dimension_numbers = #tpu.dot_dimension_numbers<[1], [0], [0], [1], [0, 0, 1, 1], [], []>} : vector<2x32xf32>, vector<32x256xf32>, vector<2x256xf32> -> vector<2x256xf32>
      %30 = vector.shape_cast %13 : vector<2x16x32xf32> to vector<32x32xf32>
      %c0_23 = arith.constant 0 : index
      %c0_24 = arith.constant 0 : index
      %31 = vector.load %arg6[%c0_23, %c0_24] : memref<32x256xf32, #tpu.memory_space<vmem>>, vector<32x256xf32>
      %cst_25 = arith.constant dense<0.000000e+00> : vector<32x256xf32>
      %32 = tpu.matmul %30, %31, %cst_25 {dimension_numbers = #tpu.dot_dimension_numbers<[1], [0], [0], [1], [0, 0, 1, 1], [], []>} : vector<32x32xf32>, vector<32x256xf32>, vector<32x256xf32> -> vector<32x256xf32>
      %c0_26 = arith.constant 0 : index
      %c0_27 = arith.constant 0 : index
      %33 = vector.load %arg7[%c0_26, %c0_27] : memref<32x256xf32, #tpu.memory_space<vmem>>, vector<32x256xf32>
      %cst_28 = arith.constant dense<0.000000e+00> : vector<32x256xf32>
      %34 = tpu.matmul %30, %33, %cst_28 {dimension_numbers = #tpu.dot_dimension_numbers<[1], [0], [0], [1], [0, 0, 1, 1], [], []>} : vector<32x32xf32>, vector<32x256xf32>, vector<32x256xf32> -> vector<32x256xf32>
      %35 = tpu.iota {dimensions = array<i32: 0>} : vector<256x4xi32>
      %36 = tpu.iota {dimensions = array<i32: 1>} : vector<256x4xi32>
      %c64_i32 = arith.constant 64 : i32
      %37 = vector.broadcast %c64_i32 : i32 to vector<256x4xi32>
      %38 = arith.muli %36, %37 : vector<256x4xi32>
      %39 = arith.cmpi sge, %35, %38 : vector<256x4xi32>
      %c1_i32 = arith.constant 1 : i32
      %40 = vector.broadcast %c1_i32 : i32 to vector<256x4xi32>
      %41 = arith.addi %36, %40 : vector<256x4xi32>
      %c64_i32_29 = arith.constant 64 : i32
      %42 = vector.broadcast %c64_i32_29 : i32 to vector<256x4xi32>
      %43 = arith.muli %41, %42 : vector<256x4xi32>
      %44 = arith.cmpi slt, %35, %43 : vector<256x4xi32>
      %45 = arith.andi %39, %44 : vector<256x4xi1>
      %46 = arith.extui %45 : vector<256x4xi1> to vector<256x4xi32>
      %47 = arith.sitofp %46 : vector<256x4xi32> to vector<256x4xf32>
      %48 = tpu.iota {dimensions = array<i32: 0>} : vector<4x256xi32>
      %49 = tpu.iota {dimensions = array<i32: 1>} : vector<4x256xi32>
      %c64_i32_30 = arith.constant 64 : i32
      %50 = vector.broadcast %c64_i32_30 : i32 to vector<4x256xi32>
      %51 = arith.muli %48, %50 : vector<4x256xi32>
      %52 = arith.cmpi sge, %49, %51 : vector<4x256xi32>
      %c1_i32_31 = arith.constant 1 : i32
      %53 = vector.broadcast %c1_i32_31 : i32 to vector<4x256xi32>
      %54 = arith.addi %48, %53 : vector<4x256xi32>
      %c64_i32_32 = arith.constant 64 : i32
      %55 = vector.broadcast %c64_i32_32 : i32 to vector<4x256xi32>
      %56 = arith.muli %54, %55 : vector<4x256xi32>
      %57 = arith.cmpi slt, %49, %56 : vector<4x256xi32>
      %58 = arith.andi %52, %57 : vector<4x256xi1>
      %59 = arith.extui %58 : vector<4x256xi1> to vector<4x256xi32>
      %60 = arith.sitofp %59 : vector<4x256xi32> to vector<4x256xf32>
      %61 = vector.shape_cast %32 : vector<32x256xf32> to vector<2x16x256xf32>
      %62 = vector.shape_cast %34 : vector<32x256xf32> to vector<2x16x256xf32>
      %63 = vector.shape_cast %29 : vector<2x256xf32> to vector<2x1x256xf32>
      %64 = vector.broadcast %63 : vector<2x1x256xf32> to vector<2x16x256xf32>
      %65 = arith.mulf %64, %61 : vector<2x16x256xf32>
      %66 = vector.shape_cast %65 : vector<2x16x256xf32> to vector<32x256xf32>
      %cst_33 = arith.constant dense<0.000000e+00> : vector<32x4xf32>
      %67 = tpu.matmul %66, %47, %cst_33 {dimension_numbers = #tpu.dot_dimension_numbers<[1], [0], [0], [1], [0, 0, 1, 1], [], []>} : vector<32x256xf32>, vector<256x4xf32>, vector<32x4xf32> -> vector<32x4xf32>
      %68 = vector.shape_cast %67 : vector<32x4xf32> to vector<2x16x4xf32>
      %cst_34 = arith.constant 0.176776692 : f32
      %69 = vector.broadcast %cst_34 : f32 to vector<2x16x4xf32>
      %70 = arith.mulf %68, %69 : vector<2x16x4xf32>
      %cst_35 = arith.constant -1.000000e+01 : f32
      %71 = vector.broadcast %cst_35 : f32 to vector<2x16x1xf32>
      %72 = arith.cmpf olt, %14, %71 : vector<2x16x1xf32>
      %cst_36 = arith.constant 0xFF800000 : f32
      %73 = vector.shape_cast %72 : vector<2x16x1xi1> to vector<2x16x1xi1>
      %74 = vector.broadcast %73 : vector<2x16x1xi1> to vector<2x16x4xi1>
      %75 = vector.broadcast %cst_36 : f32 to vector<2x16x4xf32>
      %76 = arith.select %74, %75, %70 : vector<2x16x4xi1>, vector<2x16x4xf32>
      %cst_37 = arith.constant dense<0xFF800000> : vector<2x4xf32>
      %77 = vector.multi_reduction <maximumf>, %76, %cst_37 [1] : vector<2x16x4xf32> to vector<2x4xf32>
      %78 = vector.shape_cast %77 : vector<2x4xf32> to vector<2x1x4xf32>
      %79 = vector.broadcast %78 : vector<2x1x4xf32> to vector<2x16x4xf32>
      %80 = arith.subf %76, %79 : vector<2x16x4xf32>
      %81 = math.exp %80 : vector<2x16x4xf32>
      %cst_38 = arith.constant dense<0.000000e+00> : vector<2x4xf32>
      %82 = vector.multi_reduction <add>, %81, %cst_38 [1] : vector<2x16x4xf32> to vector<2x4xf32>
      %83 = vector.shape_cast %82 : vector<2x4xf32> to vector<2x1x4xf32>
      %84 = tpu.reciprocal %83 {approx = true} : vector<2x1x4xf32> -> vector<2x1x4xf32>
      %85 = vector.broadcast %84 : vector<2x1x4xf32> to vector<2x16x4xf32>
      %86 = arith.mulf %81, %85 : vector<2x16x4xf32>
      %87 = vector.shape_cast %86 : vector<2x16x4xf32> to vector<32x4xf32>
      %cst_39 = arith.constant dense<0.000000e+00> : vector<32x256xf32>
      %88 = tpu.matmul %87, %60, %cst_39 {dimension_numbers = #tpu.dot_dimension_numbers<[1], [0], [0], [1], [0, 0, 1, 1], [], []>} : vector<32x4xf32>, vector<4x256xf32>, vector<32x256xf32> -> vector<32x256xf32>
      %89 = vector.shape_cast %88 : vector<32x256xf32> to vector<2x16x256xf32>
      %90 = arith.mulf %89, %62 : vector<2x16x256xf32>
      %cst_40 = arith.constant dense<0.000000e+00> : vector<2x256xf32>
      %91 = vector.multi_reduction <add>, %90, %cst_40 [1] : vector<2x16x256xf32> to vector<2x256xf32>
      %c0_41 = arith.constant 0 : index
      %c0_42 = arith.constant 0 : index
      %92 = vector.load %arg8[%c0_41, %c0_42] : memref<256x32xf32, #tpu.memory_space<vmem>>, vector<256x32xf32>
      %cst_43 = arith.constant dense<0.000000e+00> : vector<2x32xf32>
      %93 = tpu.matmul %91, %92, %cst_43 {dimension_numbers = #tpu.dot_dimension_numbers<[1], [0], [0], [1], [0, 0, 1, 1], [], []>} : vector<2x256xf32>, vector<256x32xf32>, vector<2x32xf32> -> vector<2x32xf32>
      %c0_44 = arith.constant 0 : index
      %c0_45 = arith.constant 0 : index
      %94 = vector.load %arg9[%c0_44, %c0_45] : memref<1x32xf32, #tpu.memory_space<vmem>>, vector<1x32xf32>
      %95 = vector.broadcast %94 : vector<1x32xf32> to vector<2x32xf32>
      %96 = arith.addf %93, %95 : vector<2x32xf32>
      %c0_46 = arith.constant 0 : index
      %c0_47 = arith.constant 0 : index
      %97 = vector.load %arg10[%c0_46, %c0_47] : memref<2x32xf32, #tpu.memory_space<vmem>>, vector<2x32xf32>
      tpu.vector_store %arg10[%c0_46, %c0_47], %96 {strides = array<i32>} : memref<2x32xf32, #tpu.memory_space<vmem>>, vector<2x32xf32>,
    } else {
    }
    return
  }
  func.func @transform_0(%arg0: i32, %arg1: i32) -> (i32, i32, i32) {
    %c0_i32 = arith.constant 0 : i32
    %c0_i32_0 = arith.constant 0 : i32
    %c0_i32_1 = arith.constant 0 : i32
    return %arg0, %c0_i32, %c0_i32_0 : i32, i32, i32
  }
  func.func @transform_1(%arg0: i32, %arg1: i32) -> (i32, i32, i32) {
    %c0_i32 = arith.constant 0 : i32
    %c0_i32_0 = arith.constant 0 : i32
    %c0_i32_1 = arith.constant 0 : i32
    return %arg0, %c0_i32, %c0_i32_0 : i32, i32, i32
  }
  func.func @transform_2(%arg0: i32, %arg1: i32) -> (i32, i32, i32, i32) {
    %c0_i32 = arith.constant 0 : i32
    %c0_i32_0 = arith.constant 0 : i32
    %c0_i32_1 = arith.constant 0 : i32
    return %arg0, %c0_i32, %arg1, %c0_i32_0 : i32, i32, i32, i32
  }
  func.func @transform_3(%arg0: i32, %arg1: i32) -> (i32, i32) {
    %c0_i32 = arith.constant 0 : i32
    %c0_i32_0 = arith.constant 0 : i32
    %c0_i32_1 = arith.constant 0 : i32
    return %c0_i32, %c0_i32_0 : i32, i32
  }
  func.func @transform_4(%arg0: i32, %arg1: i32) -> (i32, i32) {
    %c0_i32 = arith.constant 0 : i32
    %c0_i32_0 = arith.constant 0 : i32
    %c0_i32_1 = arith.constant 0 : i32
    return %c0_i32, %c0_i32_0 : i32, i32
  }
  func.func @transform_5(%arg0: i32, %arg1: i32) -> (i32, i32) {
    %c0_i32 = arith.constant 0 : i32
    %c0_i32_0 = arith.constant 0 : i32
    %c0_i32_1 = arith.constant 0 : i32
    return %c0_i32, %c0_i32_0 : i32, i32
  }
  func.func @transform_6(%arg0: i32, %arg1: i32) -> (i32, i32) {
    %c0_i32 = arith.constant 0 : i32
    %c0_i32_0 = arith.constant 0 : i32
    %c0_i32_1 = arith.constant 0 : i32
    return %c0_i32, %c0_i32_0 : i32, i32
  }
  func.func @transform_7(%arg0: i32, %arg1: i32) -> (i32, i32) {
    %c0_i32 = arith.constant 0 : i32
    %c0_i32_0 = arith.constant 0 : i32
    %c0_i32_1 = arith.constant 0 : i32
    return %c0_i32, %c0_i32_0 : i32, i32
  }
  func.func @transform_8(%arg0: i32, %arg1: i32) -> (i32, i32) {
    %c0_i32 = arith.constant 0 : i32
    %c0_i32_0 = arith.constant 0 : i32
    return %arg0, %c0_i32 : i32, i32
  }
  func.func @transform_9(%arg0: i32, %arg1: i32) -> (i32, i32) {
    %c0_i32 = arith.constant 0 : i32
    %c0_i32_0 = arith.constant 0 : i32
    return %arg0, %c0_i32 : i32, i32
  }
}

</mosaic_0001>

<llo_original>
// kernel: tpu_custom_call.1
$region0: #{tpu_custom_call.1}
  #allocation0 [shape = 'u32[]', space=smem, size = 0x4, offset = 0x4, fixed_abs, tag = 'smem constant byte address 0x4 - core index']
  #allocation1 [shape = 'u32[144,128]{1,0:T(1,128)}', space=vmem, size = 0x12000, scoped, tag = 'internal scratch']
  %s0 = inlined_call_operand.vmem [shape: f32[2,16,32], index: 0, kind: input, shape index: {}]
  %s1 = inlined_call_operand.vmem [shape: f32[2,16,1], index: 1, kind: input, shape index: {}]
  %s2 = inlined_call_operand.vmem [shape: f32[2,4,16,16], index: 2, kind: input, shape index: {}]
  %s3 = inlined_call_operand.vmem [shape: f32[32,256], index: 3, kind: input, shape index: {}]
  %s4 = inlined_call_operand.vmem [shape: f32[32,256], index: 4, kind: input, shape index: {}]
  %s5 = inlined_call_operand.vmem [shape: f32[32,256], index: 5, kind: input, shape index: {}]
  %s6 = inlined_call_operand.vmem [shape: f32[256,32], index: 6, kind: input, shape index: {}]
  %s7 = inlined_call_operand.vmem [shape: f32[1,32], index: 7, kind: input, shape index: {}]
  %s8 = inlined_call_operand.hbm [shape: f32[2,32], index: 8, kind: output, shape index: {0}]
  %s9 = inlined_call_operand.hbm [shape: f32[2,16], index: 9, kind: output, shape index: {1}]
  %10 = xla_tuple %s8, %s9
  %s11 = sld [smem:[#allocation0]]
  $region119: #{tpu_custom_call.1} parent=0
    _
  %s13 = ssub.s32 1, %s11
  %s14 = scalar_select 0, %s13, %s11
  $region1: #{tpu_custom_call.1} parent=0
    #allocation2 [shape = 'u8[65536]{0}', space=vmem, size = 0x10000, scoped, tag = 'input window, operand 2']
    #allocation3 [shape = 'u8[1024]{0}', space=vmem, size = 0x400, scoped, tag = 'output window, operand 0, single buffered']
    #allocation4 [shape = 's32[2]{0}', space=sflag, size = 0x8, scoped, tag = 'scoped memory for tpu_custom_call.1']
    #allocation5 [shape = 'u8[1024]{0}', space=vmem, size = 0x400, scoped, tag = 'output window, operand 1, single buffered']
    #allocation6 [shape = 's32[1]{0}', space=sflag, size = 0x4, scoped, tag = 'scoped memory for tpu_custom_call.1']
    %15 = vsyncpa [#allocation4], 0
    %16 = vsyncpa [#allocation6], 0
    loop: start=0, step=1, limit=4
    $region2: #{tpu_custom_call.1} parent=1 // loop_pre_header
      _
    $region3: #{tpu_custom_call.1} parent=1 // loop_header
      %s18 = sphi 0, %s22
      %p19 = scmp.ge.s32.totalorder %s18, 4
      %s25 = sphi 0, %s37
      %s26 = sphi 0, %s33
      %s27 = sphi 0, %s25
      %s28 = sphi 0, %s26
      %s29 = sphi 0, %s27
      %s30 = sphi 0, %s28
      %s40 = sphi 0, %s42
      %s43 = sphi 0, %s40
      %s44 = sphi 0, %s43
      %s60 = sphi 0, %s44
      %s66 = sphi 0, %s68
      %s69 = sphi 0, %s66
      %s70 = sphi 0, %s69
      %s86 = sphi 0, %s70
      %s94 = sphi 0, %s96
      %s97 = sphi 0, %s94
      %s98 = sphi 0, %s97
      %s114 = sphi 0, %s98
      %s118 = sphi 0, %s118
      %s120 = sphi 0, %s118
      %s121 = sphi 0, %s120
      %s135 = sphi 0, %s121
      %s139 = sphi 0, %s139
      %s141 = sphi 0, %s139
      %s142 = sphi 0, %s141
      %s156 = sphi 0, %s142
      %s160 = sphi 0, %s160
      %s162 = sphi 0, %s160
      %s163 = sphi 0, %s162
      %s177 = sphi 0, %s163
      %s181 = sphi 0, %s181
      %s183 = sphi 0, %s181
      %s184 = sphi 0, %s183
      %s198 = sphi 0, %s184
      %s202 = sphi 0, %s202
      %s204 = sphi 0, %s202
      %s205 = sphi 0, %s204
      %s219 = sphi 0, %s205
      %s225 = sphi 0, %s227
      %s228 = sphi 0, %s225
      %s229 = sphi 0, %s228
      %s245 = sphi 0, %s229
      %s251 = sphi 0, %s253
      %s254 = sphi 0, %s251
      %s255 = sphi 0, %s254
      %s271 = sphi 0, %s255
    $region4: #{tpu_custom_call.1} parent=1 // loop_header_branch
      %21 = sbr.rel (%p19) target = $region8
    $region5: #{tpu_custom_call.1} parent=1 // loop_body
      %s23 = ssub.s32 %s18, 1
      %s24 = ssub.s32 %s18, 2
      %s31 = sadd.s32 1, %s26
      %p32 = scmp.ge.s32.totalorder %s31, 2
      %s33 = scalar_select %p32, 0, %s31
      %s34 = sadd.s32 1, %s25
      %s35 = scalar_select %p32, %s34, %s25
      %p36 = scmp.ge.s32.totalorder %s35, 1
      %s37 = scalar_select %p36, 0, %s35
      %s38 = ssub.s32 %s25, %s37
      %p39 = scmp.eq.s32.totalorder %s38, 0
      %s41 = sadd.s32 %s40, 1
      %s42 = scalar_select %p39, %s40, %s41
      %p45 = pneg %p39
      %p46 = scmp.eq.s32.totalorder %s18, 1
      %p47 = por %p45, %p46
      %p48 = scmp.ne.s32.totalorder %s40, %s43
      %p49 = scmp.eq.s32.totalorder %s18, 0
      %p50 = por %p48, %p49
      %p51 = scmp.ne.s32.totalorder %s40, %s43
      %p52 = scmp.eq.s32.totalorder %s23, 1
      %p53 = por %p51, %p52
      %p54 = scmp.ne.s32.totalorder %s43, %s44
      %p55 = scmp.eq.s32.totalorder %s23, 0
      %p56 = por %p54, %p55
      %p57 = scmp.ne.s32.totalorder %s43, %s44
      %p58 = scmp.eq.s32.totalorder %s24, 1
      %p59 = por %p57, %p58
      %p61 = scmp.ne.s32.totalorder %s44, %s60
      %p62 = scmp.eq.s32.totalorder %s24, 0
      %p63 = por %p61, %p62
      %s64 = ssub.s32 %s25, %s37
      %p65 = scmp.eq.s32.totalorder %s64, 0
      %s67 = sadd.s32 %s66, 1
      %s68 = scalar_select %p65, %s66, %s67
      %p71 = pneg %p65
      %p72 = scmp.eq.s32.totalorder %s18, 1
      %p73 = por %p71, %p72
      %p74 = scmp.ne.s32.totalorder %s66, %s69
      %p75 = scmp.eq.s32.totalorder %s18, 0
      %p76 = por %p74, %p75
      %p77 = scmp.ne.s32.totalorder %s66, %s69
      %p78 = scmp.eq.s32.totalorder %s23, 1
      %p79 = por %p77, %p78
      %p80 = scmp.ne.s32.totalorder %s69, %s70
      %p81 = scmp.eq.s32.totalorder %s23, 0
      %p82 = por %p80, %p81
      %p83 = scmp.ne.s32.totalorder %s69, %s70
      %p84 = scmp.eq.s32.totalorder %s24, 1
      %p85 = por %p83, %p84
      %p87 = scmp.ne.s32.totalorder %s70, %s86
      %p88 = scmp.eq.s32.totalorder %s24, 0
      %p89 = por %p87, %p88
      %s90 = ssub.s32 %s25, %s37
      %s91 = ssub.s32 %s26, %s33
      %s92 = sor.u32 %s90, %s91
      %p93 = scmp.eq.s32.totalorder %s92, 0
      %s95 = sadd.s32 %s94, 1
      %s96 = scalar_select %p93, %s94, %s95
      %p99 = pneg %p93
      %p100 = scmp.eq.s32.totalorder %s18, 1
      %p101 = por %p99, %p100
      %p102 = scmp.ne.s32.totalorder %s94, %s97
      %p103 = scmp.eq.s32.totalorder %s18, 0
      %p104 = por %p102, %p103
      %p105 = scmp.ne.s32.totalorder %s94, %s97
      %p106 = scmp.eq.s32.totalorder %s23, 1
      %p107 = por %p105, %p106
      %p108 = scmp.ne.s32.totalorder %s97, %s98
      %p109 = scmp.eq.s32.totalorder %s23, 0
      %p110 = por %p108, %p109
      %p111 = scmp.ne.s32.totalorder %s97, %s98
      %p112 = scmp.eq.s32.totalorder %s24, 1
      %p113 = por %p111, %p112
      %p115 = scmp.ne.s32.totalorder %s98, %s114
      %p116 = scmp.eq.s32.totalorder %s24, 0
      %p117 = por %p115, %p116
      %s119 = sadd.s32 %s118, 1
      %p122 = scmp.eq.s32.totalorder %s18, 1
      %p123 = scmp.ne.s32.totalorder %s118, %s120
      %p124 = scmp.eq.s32.totalorder %s18, 0
      %p125 = por %p123, %p124
      %p126 = scmp.ne.s32.totalorder %s118, %s120
      %p127 = scmp.eq.s32.totalorder %s23, 1
      %p128 = por %p126, %p127
      %p129 = scmp.ne.s32.totalorder %s120, %s121
      %p130 = scmp.eq.s32.totalorder %s23, 0
      %p131 = por %p129, %p130
      %p132 = scmp.ne.s32.totalorder %s120, %s121
      %p133 = scmp.eq.s32.totalorder %s24, 1
      %p134 = por %p132, %p133
      %p136 = scmp.ne.s32.totalorder %s121, %s135
      %p137 = scmp.eq.s32.totalorder %s24, 0
      %p138 = por %p136, %p137
      %s140 = sadd.s32 %s139, 1
      %p143 = scmp.eq.s32.totalorder %s18, 1
      %p144 = scmp.ne.s32.totalorder %s139, %s141
      %p145 = scmp.eq.s32.totalorder %s18, 0
      %p146 = por %p144, %p145
      %p147 = scmp.ne.s32.totalorder %s139, %s141
      %p148 = scmp.eq.s32.totalorder %s23, 1
      %p149 = por %p147, %p148
      %p150 = scmp.ne.s32.totalorder %s141, %s142
      %p151 = scmp.eq.s32.totalorder %s23, 0
      %p152 = por %p150, %p151
      %p153 = scmp.ne.s32.totalorder %s141, %s142
      %p154 = scmp.eq.s32.totalorder %s24, 1
      %p155 = por %p153, %p154
      %p157 = scmp.ne.s32.totalorder %s142, %s156
      %p158 = scmp.eq.s32.totalorder %s24, 0
      %p159 = por %p157, %p158
      %s161 = sadd.s32 %s160, 1
      %p164 = scmp.eq.s32.totalorder %s18, 1
      %p165 = scmp.ne.s32.totalorder %s160, %s162
      %p166 = scmp.eq.s32.totalorder %s18, 0
      %p167 = por %p165, %p166
      %p168 = scmp.ne.s32.totalorder %s160, %s162
      %p169 = scmp.eq.s32.totalorder %s23, 1
      %p170 = por %p168, %p169
      %p171 = scmp.ne.s32.totalorder %s162, %s163
      %p172 = scmp.eq.s32.totalorder %s23, 0
      %p173 = por %p171, %p172
      %p174 = scmp.ne.s32.totalorder %s162, %s163
      %p175 = scmp.eq.s32.totalorder %s24, 1
      %p176 = por %p174, %p175
      %p178 = scmp.ne.s32.totalorder %s163, %s177
      %p179 = scmp.eq.s32.totalorder %s24, 0
      %p180 = por %p178, %p179
      %s182 = sadd.s32 %s181, 1
      %p185 = scmp.eq.s32.totalorder %s18, 1
      %p186 = scmp.ne.s32.totalorder %s181, %s183
      %p187 = scmp.eq.s32.totalorder %s18, 0
      %p188 = por %p186, %p187
      %p189 = scmp.ne.s32.totalorder %s181, %s183
      %p190 = scmp.eq.s32.totalorder %s23, 1
      %p191 = por %p189, %p190
      %p192 = scmp.ne.s32.totalorder %s183, %s184
      %p193 = scmp.eq.s32.totalorder %s23, 0
      %p194 = por %p192, %p193
      %p195 = scmp.ne.s32.totalorder %s183, %s184
      %p196 = scmp.eq.s32.totalorder %s24, 1
      %p197 = por %p195, %p196
      %p199 = scmp.ne.s32.totalorder %s184, %s198
      %p200 = scmp.eq.s32.totalorder %s24, 0
      %p201 = por %p199, %p200
      %s203 = sadd.s32 %s202, 1
      %p206 = scmp.eq.s32.totalorder %s18, 1
      %p207 = scmp.ne.s32.totalorder %s202, %s204
      %p208 = scmp.eq.s32.totalorder %s18, 0
      %p209 = por %p207, %p208
      %p210 = scmp.ne.s32.totalorder %s202, %s204
      %p211 = scmp.eq.s32.totalorder %s23, 1
      %p212 = por %p210, %p211
      %p213 = scmp.ne.s32.totalorder %s204, %s205
      %p214 = scmp.eq.s32.totalorder %s23, 0
      %p215 = por %p213, %p214
      %p216 = scmp.ne.s32.totalorder %s204, %s205
      %p217 = scmp.eq.s32.totalorder %s24, 1
      %p218 = por %p216, %p217
      %p220 = scmp.ne.s32.totalorder %s205, %s219
      %p221 = scmp.eq.s32.totalorder %s24, 0
      %p222 = por %p220, %p221
      %s223 = ssub.s32 %s25, %s37
      %p224 = scmp.eq.s32.totalorder %s223, 0
      %s226 = sadd.s32 %s225, 1
      %s227 = scalar_select %p224, %s225, %s226
      %p230 = pneg %p224
      %p231 = scmp.eq.s32.totalorder %s18, 1
      %p232 = por %p230, %p231
      %p233 = scmp.ne.s32.totalorder %s225, %s228
      %p234 = scmp.eq.s32.totalorder %s18, 0
      %p235 = por %p233, %p234
      %p236 = scmp.ne.s32.totalorder %s225, %s228
      %p237 = scmp.eq.s32.totalorder %s23, 1
      %p238 = por %p236, %p237
      %p239 = scmp.ne.s32.totalorder %s228, %s229
      %p240 = scmp.eq.s32.totalorder %s23, 0
      %p241 = por %p239, %p240
      %p242 = scmp.ne.s32.totalorder %s228, %s229
      %p243 = scmp.eq.s32.totalorder %s24, 1
      %p244 = por %p242, %p243
      %p246 = scmp.ne.s32.totalorder %s229, %s245
      %p247 = scmp.eq.s32.totalorder %s24, 0
      %p248 = por %p246, %p247
      %s249 = ssub.s32 %s25, %s37
      %p250 = scmp.eq.s32.totalorder %s249, 0
      %s252 = sadd.s32 %s251, 1
      %s253 = scalar_select %p250, %s251, %s252
      %p256 = pneg %p250
      %p257 = scmp.eq.s32.totalorder %s18, 1
      %p258 = por %p256, %p257
      %p259 = scmp.ne.s32.totalorder %s251, %s254
      %p260 = scmp.eq.s32.totalorder %s18, 0
      %p261 = por %p259, %p260
      %p262 = scmp.ne.s32.totalorder %s251, %s254
      %p263 = scmp.eq.s32.totalorder %s23, 1
      %p264 = por %p262, %p263
      %p265 = scmp.ne.s32.totalorder %s254, %s255
      %p266 = scmp.eq.s32.totalorder %s23, 0
      %p267 = por %p265, %p266
      %p268 = scmp.ne.s32.totalorder %s254, %s255
      %p269 = scmp.eq.s32.totalorder %s24, 1
      %p270 = por %p268, %p269
      %p272 = scmp.ne.s32.totalorder %s255, %s271
      %p273 = scmp.eq.s32.totalorder %s24, 0
      %p274 = por %p272, %p273
      %p275 = scmp.le.s32.totalorder 1, %s18
      %p276 = scmp.lt.s32.totalorder %s18, 3
      %p277 = pnand %p275, %p276
      %p278 = pneg %p277
      // Predicated region
      $region9: #{tpu_custom_call.1} parent=5 // pred_check
        _
      $region10: #{tpu_custom_call.1} parent=5 // pred_check_branch
        %280 = sbr.rel (%p277) target = $region12
      $region11: #{tpu_custom_call.1} parent=5 // pred_region
        %s281 = ssub.s32 %s18, 1
        // Predicated region
        $region13: #{tpu_custom_call.1} parent=11 // pred_check
          %p282 = pneg %p56
        $region14: #{tpu_custom_call.1} parent=11 // pred_check_branch
          %284 = sbr.rel (%p282) target = $region16
        $region15: #{tpu_custom_call.1} parent=11 // pred_region
          %s285 = smul.u32 2, %s27
          %p286 = scmp.lt.s32.totalorder %s285, 1
          %s287 = scalar_select %p286, %s285, 1
          %s288 = smul.addr %s287, 2
          %s289 = smul.addr %s288, 8
          %s290 = scalar_lea.vmem %s0, %s289
          %s291 = smul.u32 2, %s27
        $region16: #{tpu_custom_call.1} parent=11 // pred_fallthru
          _
        // Predicated region
        $region17: #{tpu_custom_call.1} parent=11 // pred_check
          %p292 = pneg %p82
        $region18: #{tpu_custom_call.1} parent=11 // pred_check_branch
          %294 = sbr.rel (%p292) target = $region20
        $region19: #{tpu_custom_call.1} parent=11 // pred_region
          %s295 = smul.u32 2, %s27
          %p296 = scmp.lt.s32.totalorder %s295, 1
          %s297 = scalar_select %p296, %s295, 1
          %s298 = smul.addr %s297, 2
          %s299 = smul.addr %s298, 8
          %s300 = scalar_lea.vmem %s1, %s299
          %s301 = smul.u32 2, %s27
        $region20: #{tpu_custom_call.1} parent=11 // pred_fallthru
          _
        // Predicated region
        $region21: #{tpu_custom_call.1} parent=11 // pred_check
          %p302 = pneg %p131
        $region22: #{tpu_custom_call.1} parent=11 // pred_check_branch
          %304 = sbr.rel (%p302) target = $region24
        $region23: #{tpu_custom_call.1} parent=11 // pred_region
          _
        $region24: #{tpu_custom_call.1} parent=11 // pred_fallthru
          _
        // Predicated region
        $region25: #{tpu_custom_call.1} parent=11 // pred_check
          %p305 = pneg %p152
        $region26: #{tpu_custom_call.1} parent=11 // pred_check_branch
          %307 = sbr.rel (%p305) target = $region28
        $region27: #{tpu_custom_call.1} parent=11 // pred_region
          _
        $region28: #{tpu_custom_call.1} parent=11 // pred_fallthru
          _
        // Predicated region
        $region29: #{tpu_custom_call.1} parent=11 // pred_check
          %p308 = pneg %p173
        $region30: #{tpu_custom_call.1} parent=11 // pred_check_branch
          %310 = sbr.rel (%p308) target = $region32
        $region31: #{tpu_custom_call.1} parent=11 // pred_region
          _
        $region32: #{tpu_custom_call.1} parent=11 // pred_fallthru
          _
        // Predicated region
        $region33: #{tpu_custom_call.1} parent=11 // pred_check
          %p311 = pneg %p194
        $region34: #{tpu_custom_call.1} parent=11 // pred_check_branch
          %313 = sbr.rel (%p311) target = $region36
        $region35: #{tpu_custom_call.1} parent=11 // pred_region
          _
        $region36: #{tpu_custom_call.1} parent=11 // pred_fallthru
          _
        // Predicated region
        $region37: #{tpu_custom_call.1} parent=11 // pred_check
          %p314 = pneg %p215
        $region38: #{tpu_custom_call.1} parent=11 // pred_check_branch
          %316 = sbr.rel (%p314) target = $region40
        $region39: #{tpu_custom_call.1} parent=11 // pred_region
          _
        $region40: #{tpu_custom_call.1} parent=11 // pred_fallthru
          _
      $region12: #{tpu_custom_call.1} parent=5 // pred_fallthru
        _
      %p317 = scmp.lt.s32.totalorder %s18, 2
      // Predicated region
      $region41: #{tpu_custom_call.1} parent=5 // pred_check
        %p318 = pneg %p317
      $region42: #{tpu_custom_call.1} parent=5 // pred_check_branch
        %320 = sbr.rel (%p318) target = $region44
      $region43: #{tpu_custom_call.1} parent=5 // pred_region
        // Predicated region
        $region45: #{tpu_custom_call.1} parent=43 // pred_check
          %p321 = pneg %p104
        $region46: #{tpu_custom_call.1} parent=43 // pred_check_branch
          %323 = sbr.rel (%p321) target = $region48
        $region47: #{tpu_custom_call.1} parent=43 // pred_region
          %s324 = sand.u32 %s94, 1
          %s325 = sand.u32 %s94, 1
          %s326 = smul.addr %s325, 64
          %s327 = scalar_lea.vmem [#allocation2], %s326
          %s328 = smul.u32 2, %s25
          %s329 = smul.addr %s328, 8
          %s330 = sadd.s32 %s26, %s329
          %s331 = smul.addr %s330, 8
          %s332 = scalar_lea.vmem %s2, %s331
          // Predicated region
          $region49: #{tpu_custom_call.1} parent=47 // pred_check
            _
          $region50: #{tpu_custom_call.1} parent=47 // pred_check_branch
            %334 = sbr.rel (0) target = $region52
          $region51: #{tpu_custom_call.1} parent=47 // pred_region
            // Predicated region
            $region53: #{tpu_custom_call.1} parent=51 // pred_check
              _
            $region54: #{tpu_custom_call.1} parent=51 // pred_check_branch
              %336 = sbr.rel (0) target = $region56
            $region55: #{tpu_custom_call.1} parent=51 // pred_region
              // Predicated region
              $region68: #{tpu_custom_call.1} parent=55 // pred_check
                _
              $region69: #{tpu_custom_call.1} parent=55 // pred_check_branch
                %365 = sbr.rel (0) target = $region71
              $region70: #{tpu_custom_call.1} parent=55 // pred_region
                loop: start=0, step=1, limit=1
                $region72: #{tpu_custom_call.1} parent=70 // loop_pre_header
                  _
                $region73: #{tpu_custom_call.1} parent=70 // loop_header
                  %s367 = sphi 0, %s371
                  %p368 = scmp.ge.s32.totalorder %s367, 1
                  %s372 = sphi %s332, %s332
                  %s373 = sphi %s327, %s327
                $region74: #{tpu_custom_call.1} parent=70 // loop_header_branch
                  %370 = sbr.rel (%p368) target = $region78
                $region75: #{tpu_custom_call.1} parent=70 // loop_body
                  %v374 = vld [vmem:[%s372] sm:$0xff]
                  %375 = vst [vmem:[%s373] sm:$0xff] %v374
                  %v376 = vld [vmem:[%s372 + $0x10] sm:$0xff]
                  %377 = vst [vmem:[%s373 + $0x8] sm:$0xff] %v376
                  %v378 = vld [vmem:[%s372 + $0x20] sm:$0xff]
                  %379 = vst [vmem:[%s373 + $0x10] sm:$0xff] %v378
                  %v380 = vld [vmem:[%s372 + $0x30] sm:$0xff]
                  %381 = vst [vmem:[%s373 + $0x18] sm:$0xff] %v380
                  %v382 = vld [vmem:[%s372 + $0x40] sm:$0xff]
                  %383 = vst [vmem:[%s373 + $0x20] sm:$0xff] %v382
                  %v384 = vld [vmem:[%s372 + $0x50] sm:$0xff]
                  %385 = vst [vmem:[%s373 + $0x28] sm:$0xff] %v384
                  %v386 = vld [vmem:[%s372 + $0x60] sm:$0xff]
                  %387 = vst [vmem:[%s373 + $0x30] sm:$0xff] %v386
                  %v388 = vld [vmem:[%s372 + $0x70] sm:$0xff]
                  %389 = vst [vmem:[%s373 + $0x38] sm:$0xff] %v388
                $region76: #{tpu_custom_call.1} parent=70 // loop_footer
                  %s371 = sadd.s32 1, %s367
                $region77: #{tpu_custom_call.1} parent=70 // loop_footer_branch
                  %366 = sbr.rel target = $region73
                $region78: #{tpu_custom_call.1} parent=70 // loop_exit
                  _
              $region71: #{tpu_custom_call.1} parent=55 // pred_fallthru
                _
              // Predicated region
              $region79: #{tpu_custom_call.1} parent=55 // pred_check
                _
              $region80: #{tpu_custom_call.1} parent=55 // pred_check_branch
                %391 = sbr.rel target = $region82
              $region81: #{tpu_custom_call.1} parent=55 // pred_region
                _
              $region82: #{tpu_custom_call.1} parent=55 // pred_fallthru
                _
            $region56: #{tpu_custom_call.1} parent=51 // pred_fallthru
              _
            // Predicated region
            $region57: #{tpu_custom_call.1} parent=51 // pred_check
              _
            $region58: #{tpu_custom_call.1} parent=51 // pred_check_branch
              %338 = sbr.rel target = $region60
            $region59: #{tpu_custom_call.1} parent=51 // pred_region
              loop: start=0, step=1, limit=1
              $region61: #{tpu_custom_call.1} parent=59 // loop_pre_header
                _
              $region62: #{tpu_custom_call.1} parent=59 // loop_header
                %s341 = sphi 0, %s345
                %p342 = scmp.ge.s32.totalorder %s341, 1
                %s346 = sphi %s332, %s332
                %s347 = sphi %s327, %s327
              $region63: #{tpu_custom_call.1} parent=59 // loop_header_branch
                %344 = sbr.rel (%p342) target = $region67
              $region64: #{tpu_custom_call.1} parent=59 // loop_body
                %v348 = vld [vmem:[%s346] sm:$0xff]
                %349 = vst [vmem:[%s347] sm:$0xff] %v348
                %v350 = vld [vmem:[%s346 + $0x10] sm:$0xff]
                %351 = vst [vmem:[%s347 + $0x8] sm:$0xff] %v350
                %v352 = vld [vmem:[%s346 + $0x20] sm:$0xff]
                %353 = vst [vmem:[%s347 + $0x10] sm:$0xff] %v352
                %v354 = vld [vmem:[%s346 + $0x30] sm:$0xff]
                %355 = vst [vmem:[%s347 + $0x18] sm:$0xff] %v354
                %v356 = vld [vmem:[%s346 + $0x40] sm:$0xff]
                %357 = vst [vmem:[%s347 + $0x20] sm:$0xff] %v356
                %v358 = vld [vmem:[%s346 + $0x50] sm:$0xff]
                %359 = vst [vmem:[%s347 + $0x28] sm:$0xff] %v358
                %v360 = vld [vmem:[%s346 + $0x60] sm:$0xff]
                %361 = vst [vmem:[%s347 + $0x30] sm:$0xff] %v360
                %v362 = vld [vmem:[%s346 + $0x70] sm:$0xff]
                %363 = vst [vmem:[%s347 + $0x38] sm:$0xff] %v362
              $region65: #{tpu_custom_call.1} parent=59 // loop_footer
                %s345 = sadd.s32 1, %s341
              $region66: #{tpu_custom_call.1} parent=59 // loop_footer_branch
                %340 = sbr.rel target = $region62
              $region67: #{tpu_custom_call.1} parent=59 // loop_exit
                _
            $region60: #{tpu_custom_call.1} parent=51 // pred_fallthru
              _
          $region52: #{tpu_custom_call.1} parent=47 // pred_fallthru
            _
          %392 = vnop
        $region48: #{tpu_custom_call.1} parent=43 // pred_fallthru
          _
      $region44: #{tpu_custom_call.1} parent=5 // pred_fallthru
        _
      %p393 = scmp.le.s32.totalorder 1, %s18
      %p394 = scmp.lt.s32.totalorder %s18, 3
      %p395 = pnand %p393, %p394
      %p396 = pneg %p395
      // Predicated region
      $region83: #{tpu_custom_call.1} parent=5 // pred_check
        _
      $region84: #{tpu_custom_call.1} parent=5 // pred_check_branch
        %398 = sbr.rel (%p395) target = $region86
      $region85: #{tpu_custom_call.1} parent=5 // pred_region
        %s399 = ssub.s32 %s18, 1
        %s400 = sand.u32 %s97, 1
        %s401 = sand.u32 %s97, 1
        %s402 = smul.addr %s401, 64
        %s403 = scalar_lea.vmem [#allocation2], %s402
        // Predicated region
        $region87: #{tpu_custom_call.1} parent=85 // pred_check
          %p404 = pneg %p110
        $region88: #{tpu_custom_call.1} parent=85 // pred_check_branch
          %406 = sbr.rel (%p404) target = $region90
        $region89: #{tpu_custom_call.1} parent=85 // pred_region
          _
        $region90: #{tpu_custom_call.1} parent=85 // pred_fallthru
          _
        %s407 = smul.u32 2, %s27
        %p408 = scmp.lt.s32.totalorder %s407, 1
        %s409 = scalar_select %p408, %s407, 1
        %s410 = smul.addr %s409, 2
        %s411 = smul.addr %s410, 8
        %s412 = scalar_lea.vmem %s0, %s411
        %p413 = pneg %p56
        %p414 = pneg %p53
        %s415 = smul.u32 2, %s27
        %p416 = scmp.lt.s32.totalorder %s415, 1
        %s417 = scalar_select %p416, %s415, 1
        %s418 = smul.addr %s417, 2
        %s419 = smul.addr %s418, 8
        %s420 = scalar_lea.vmem %s1, %s419
        %p421 = pneg %p82
        %p422 = pneg %p79
        %s423 = sand.u32 %s97, 1
        %s424 = sand.u32 %s97, 1
        %s425 = smul.addr %s424, 64
        %s426 = scalar_lea.vmem [#allocation2], %s425
        %p427 = pneg %p110
        %p428 = pneg %p107
        %p429 = pneg %p131
        %p430 = pneg %p128
        %p431 = pneg %p152
        %p432 = pneg %p149
        %p433 = pneg %p173
        %p434 = pneg %p170
        %p435 = pneg %p194
        %p436 = pneg %p191
        %p437 = pneg %p215
        %p438 = pneg %p212
        %p439 = pneg %p241
        %p440 = pneg %p238
        %p441 = pneg %p267
        %p442 = pneg %p264
        %s443 = smul.u32 2, %s27
        %p444 = scmp.lt.s32.totalorder %s443, 1
        %s445 = scalar_select %p444, %s443, 1
        %s446 = smul.addr %s445, 2
        %s447 = smul.addr %s446, 8
        %s448 = scalar_lea.vmem %s0, %s447
        %s449 = smul.u32 2, %s27
        %s450 = smul.u32 2, %s27
        %p451 = scmp.lt.s32.totalorder %s450, 1
        %s452 = scalar_select %p451, %s450, 1
        %s453 = smul.addr %s452, 2
        %s454 = smul.addr %s453, 8
        %s455 = scalar_lea.vmem %s1, %s454
        %s456 = smul.u32 2, %s27
        %s457 = smul.u32 2, %s27
        %v458 = vld [vmem:[%s403] sm:$0xff]
        %v459 = vld [vmem:[%s403 + $0x8] sm:$0xff]
        %v460 = vld [vmem:[%s403 + $0x10] sm:$0xff]
        %v461 = vld [vmem:[%s403 + $0x18] sm:$0xff]
        %v462 = vld [vmem:[%s403 + $0x20] sm:$0xff]
        %v463 = vld [vmem:[%s403 + $0x28] sm:$0xff]
        %v464 = vld [vmem:[%s403 + $0x30] sm:$0xff]
        %v465 = vld [vmem:[%s403 + $0x38] sm:$0xff]
        %vm466 = vcmask 130048
        %v467 = vsel %vm466, %v458, 0.0
        %v468 = vsel %vm466, %v459, 0.0
        %v469 = vadd.f32 %v467, %v468
        %v470 = vsel %vm466, %v460, 0.0
        %v471 = vadd.f32 %v469, %v470
        %v472 = vsel %vm466, %v461, 0.0
        %v473 = vadd.f32 %v471, %v472
        %v474 = vrot.slane %v473, 4
        %v475 = vadd.f32 %v473, %v474
        %v476 = vrot.slane %v475, 2
        %v477 = vadd.f32 %v475, %v476
        %v478 = vrot.slane %v477, 1
        %v479 = vadd.f32 %v477, %v478
        %v480 = vsel %vm466, %v462, 0.0
        %v481 = vsel %vm466, %v463, 0.0
        %v482 = vadd.f32 %v480, %v481
        %v483 = vsel %vm466, %v464, 0.0
        %v484 = vadd.f32 %v482, %v483
        %v485 = vsel %vm466, %v465, 0.0
        %v486 = vadd.f32 %v484, %v485
        %v487 = vrot.slane %v486, 4
        %v488 = vadd.f32 %v486, %v487
        %v489 = vrot.slane %v488, 2
        %v490 = vadd.f32 %v488, %v489
        %v491 = vrot.slane %v490, 1
        %v492 = vadd.f32 %v490, %v491
        %v493 = vmul.f32 %v479, 0.25
        %v494 = vmul.f32 %v492, 0.25
        %p495 = scmp.eq.s32.totalorder %s28, 0
        // Predicated region
        $region91: #{tpu_custom_call.1} parent=85 // pred_check
          %p496 = pneg %p495
        $region92: #{tpu_custom_call.1} parent=85 // pred_check_branch
          %498 = sbr.rel (%p496) target = $region94
        $region93: #{tpu_custom_call.1} parent=85 // pred_region
          %vm499 = vcmask 123904
          %500 = vst.msk [vmem:[#allocation5] sm:$0x3] %vm499, 0.0
        $region94: #{tpu_custom_call.1} parent=85 // pred_fallthru
          _
        %v501 = vld [vmem:[#allocation5] sm:$0x3]
        %vm504 = vcmask 1041409
        %v505 = vsel %vm504, %v494, %v493
        %v507 = vadd.f32 %v501, %v505
        %vm508 = vcmask 123904
        %509 = vst.msk [vmem:[#allocation5] sm:$0x3] %vm508, %v507
        // Predicated region
        $region95: #{tpu_custom_call.1} parent=85 // pred_check
          %p510 = pneg %p495
        $region96: #{tpu_custom_call.1} parent=85 // pred_check_branch
          %512 = sbr.rel (%p510) target = $region98
        $region97: #{tpu_custom_call.1} parent=85 // pred_region
          %v513 = vld [vmem:[%s448] sm:$0xff]
          %v514 = vld [vmem:[%s448 + $0x8] sm:$0xff]
          %v515 = vld [vmem:[%s448 + $0x10] sm:$0xff]
          %v516 = vld [vmem:[%s448 + $0x18] sm:$0xff]
          %v517 = vld [vmem:[%s455] sm:$0xff]
          %v518 = vld [vmem:[%s455 + $0x8] sm:$0xff]
          %v519 = vld [vmem:[%s455 + $0x10] sm:$0xff]
          %v520 = vld [vmem:[%s455 + $0x18] sm:$0xff]
          %vm521 = vcmask 7168
          %v522 = vsel %vm521, %v517, -inf
          %v523 = vsel %vm521, %v518, -inf
          %v524 = vmax.f32 %v522, %v523
          %v525 = vrot.slane %v524, 4
          %v526 = vmax.f32 %v524, %v525
          %v527 = vrot.slane %v526, 2
          %v528 = vmax.f32 %v526, %v527
          %v529 = vrot.slane %v528, 1
          %v530 = vmax.f32 %v528, %v529
          %v531 = vsel %vm521, %v519, -inf
          %v532 = vsel %vm521, %v520, -inf
          %v533 = vmax.f32 %v531, %v532
          %v534 = vrot.slane %v533, 4
          %v535 = vmax.f32 %v533, %v534
          %v536 = vrot.slane %v535, 2
          %v537 = vmax.f32 %v535, %v536
          %v538 = vrot.slane %v537, 1
          %v539 = vmax.f32 %v537, %v538
          %v540 = vsub.f32 %v517, %v530
          %v541 = vsub.f32 %v518, %v530
          %v542 = vsub.f32 %v519, %v539
          %v543 = vsub.f32 %v520, %v539
          %v544 = vmul.f32 %v540, 1.442695
          %v545 = vpow.pop %v544
          %v546 = vmul.f32 %v541, 1.442695
          %v547 = vpow.pop %v546
          %v548 = vmul.f32 %v542, 1.442695
          %v549 = vpow.pop %v548
          %v550 = vmul.f32 %v543, 1.442695
          %v551 = vpow.pop %v550
          %v552 = vsel %vm521, %v545, 0.0
          %v553 = vsel %vm521, %v547, 0.0
          %v554 = vadd.f32 %v552, %v553
          %v555 = vrot.slane %v554, 4
          %v556 = vadd.f32 %v554, %v555
          %v557 = vrot.slane %v556, 2
          %v558 = vadd.f32 %v556, %v557
          %v559 = vrot.slane %v558, 1
          %v560 = vadd.f32 %v558, %v559
          %v561 = vsel %vm521, %v549, 0.0
          %v562 = vsel %vm521, %v551, 0.0
          %v563 = vadd.f32 %v561, %v562
          %v564 = vrot.slane %v563, 4
          %v565 = vadd.f32 %v563, %v564
          %v566 = vrot.slane %v565, 2
          %v567 = vadd.f32 %v565, %v566
          %v568 = vrot.slane %v567, 1
          %v569 = vadd.f32 %v567, %v568
          %v570 = vrcp.pop %v560
          %v571 = vrcp.pop %v569
          %v572 = vmul.f32 %v545, %v570
          %v573 = vmul.f32 %v547, %v570
          %v574 = vmul.f32 %v549, %v571
          %v575 = vmul.f32 %v551, %v571
          %577 = vset.pattern.permute.xlu0 0
          %578 = vperm.xlu0 %577, %v572
          %v579 = vpop.permute.xlu0 %578
          %582 = vset.pattern.permute.xlu0 0
          %583 = vperm.xlu0 %582, %v573
          %v584 = vpop.permute.xlu0 %583
          %587 = vset.pattern.permute.xlu0 0
          %588 = vperm.xlu0 %587, %v574
          %v589 = vpop.permute.xlu0 %588
          %592 = vset.pattern.permute.xlu0 0
          %593 = vperm.xlu0 %592, %v575
          %v594 = vpop.permute.xlu0 %593
          %v596 = vmul.f32 %v579, %v513
          %v597 = vmul.f32 %v584, %v514
          %v598 = vmul.f32 %v589, %v515
          %v599 = vmul.f32 %v594, %v516
          %vm600 = vcmask 261120
          %v601 = vsel %vm600, %v596, 0.0
          %v602 = vsel %vm600, %v597, 0.0
          %v603 = vadd.f32 %v601, %v602
          %v604 = vrot.slane %v603, 4
          %v605 = vadd.f32 %v603, %v604
          %v606 = vrot.slane %v605, 2
          %v607 = vadd.f32 %v605, %v606
          %v608 = vrot.slane %v607, 1
          %v609 = vadd.f32 %v607, %v608
          %v610 = vsel %vm600, %v598, 0.0
          %v611 = vsel %vm600, %v599, 0.0
          %v612 = vadd.f32 %v610, %v611
          %v613 = vrot.slane %v612, 4
          %v614 = vadd.f32 %v612, %v613
          %v615 = vrot.slane %v614, 2
          %v616 = vadd.f32 %v614, %v615
          %v617 = vrot.slane %v616, 1
          %v618 = vadd.f32 %v616, %v617
          %v619 = vld [vmem:[%s3] sm:$0xff]
          %v620 = vld [vmem:[%s3 + $0x8] sm:$0xff]
          %v621 = vld [vmem:[%s3 + $0x10] sm:$0xff]
          %v622 = vld [vmem:[%s3 + $0x18] sm:$0xff]
          %v623 = vld [vmem:[%s3 + $0x20] sm:$0xff]
          %v624 = vld [vmem:[%s3 + $0x28] sm:$0xff]
          %v625 = vld [vmem:[%s3 + $0x30] sm:$0xff]
          %v626 = vld [vmem:[%s3 + $0x38] sm:$0xff]
          %v629 = vsel %vm504, %v618, %v609
          %v630 = vsel %vm600, %v629, 0
          %632 = vmatprep.subr.mxu0 %v620
          %633 = vmatpush1.msra.mxu0 %v619
          %634 = vmatprep.subr.mxu0 %v622
          %635 = vmatpush1.msra.mxu0 %v621
          %636 = vmatprep.subr.mxu0 %v624
          %637 = vmatpush1.msra.mxu0 %v623
          %638 = vmatprep.subr.mxu0 %v626
          %639 = vmatpush1.msra.mxu0 %v625
          %640 = vmatprep.subr.mxu0 0.0
          %641 = vmatpush1.msra.mxu0 0.0
          %642 = vmatprep.subr.mxu0 0.0
          %643 = vmatpush1.msra.mxu0 0.0
          %644 = vmatprep.subr.mxu0 0.0
          %645 = vmatpush1.msra.mxu0 0.0
          %646 = vmatprep.subr.mxu0 0.0
          %647 = vmatpush1.msra.mxu0 0.0
          %648 = vmatprep.subr.mxu0 0.0
          %649 = vmatpush1.msra.mxu0 0.0
          %650 = vmatprep.subr.mxu0 0.0
          %651 = vmatpush1.msra.mxu0 0.0
          %652 = vmatprep.subr.mxu0 0.0
          %653 = vmatpush1.msra.mxu0 0.0
          %654 = vmatprep.subr.mxu0 0.0
          %655 = vmatpush1.msra.mxu0 0.0
          %656 = vmatprep.subr.mxu0 0.0
          %657 = vmatpush1.msra.mxu0 0.0
          %658 = vmatprep.subr.mxu0 0.0
          %659 = vmatpush1.msra.mxu0 0.0
          %660 = vmatprep.subr.mxu0 0.0
          %661 = vmatpush1.msra.mxu0 0.0
          %662 = vmatprep.subr.mxu0 0.0
          %663 = vmatpush1.msra.mxu0 0.0
          %664 = vmatprep.subr.mxu0 0.0
          %665 = vmatpush1.msra.mxu0 0.0
          %666 = vmatprep.subr.mxu0 0.0
          %667 = vmatpush1.msra.mxu0 0.0
          %668 = vmatprep.subr.mxu0 0.0
          %669 = vmatpush1.msra.mxu0 0.0
          %670 = vmatprep.subr.mxu0 0.0
          %671 = vmatpush1.msra.mxu0 0.0
          %672 = vmatprep.subr.mxu0 0.0
          %673 = vmatpush1.msra.mxu0 0.0
          %674 = vmatprep.subr.mxu0 0.0
          %675 = vmatpush1.msra.mxu0 0.0
          %676 = vmatprep.subr.mxu0 0.0
          %677 = vmatpush1.msra.mxu0 0.0
          %678 = vmatprep.subr.mxu0 0.0
          %679 = vmatpush1.msra.mxu0 0.0
          %680 = vmatprep.subr.mxu0 0.0
          %681 = vmatpush1.msra.mxu0 0.0
          %682 = vmatprep.subr.mxu0 0.0
          %683 = vmatpush1.msra.mxu0 0.0
          %684 = vmatprep.subr.mxu0 0.0
          %685 = vmatpush1.msra.mxu0 0.0
          %686 = vmatprep.subr.mxu0 0.0
          %687 = vmatpush1.msra.mxu0 0.0
          %688 = vmatprep.subr.mxu0 0.0
          %689 = vmatpush1.msra.mxu0 0.0
          %690 = vmatprep.subr.mxu0 0.0
          %691 = vmatpush1.msra.mxu0 0.0
          %692 = vmatprep.subr.mxu0 0.0
          %693 = vmatpush1.msra.mxu0 0.0
          %694 = vmatprep.subr.mxu0 0.0
          %695 = vmatpush1.msra.mxu0 0.0
          %696 = vmatprep.mubr.f32.mxu0 0.0
          %697 = vmatmul.mubr.f32.gmra.mrb[0].mxu0 %v630
          %v698 = vpop.f32.mrb[0].mxu0
          %v699 = vadd.f32 0.0, %v698
          %v700 = vpop.f32.mrb[0].mxu0
          %v701 = vadd.f32 0.0, %v700
          %702 = vdwg.mxu0
          %v703 = vld [vmem:[%s4] sm:$0xff]
          %v704 = vld [vmem:[%s4 + $0x8] sm:$0xff]
          %v705 = vld [vmem:[%s4 + $0x10] sm:$0xff]
          %v706 = vld [vmem:[%s4 + $0x18] sm:$0xff]
          %v707 = vld [vmem:[%s4 + $0x20] sm:$0xff]
          %v708 = vld [vmem:[%s4 + $0x28] sm:$0xff]
          %v709 = vld [vmem:[%s4 + $0x30] sm:$0xff]
          %v710 = vld [vmem:[%s4 + $0x38] sm:$0xff]
          %v712 = vsel %vm600, %v513, 0
          %v715 = vsel %vm600, %v514, 0
          %v718 = vsel %vm600, %v515, 0
          %v721 = vsel %vm600, %v516, 0
          %723 = vmatprep.subr.mxu0 %v704
          %724 = vmatpush1.msra.mxu0 %v703
          %725 = vmatprep.subr.mxu0 %v706
          %726 = vmatpush1.msra.mxu0 %v705
          %727 = vmatprep.subr.mxu0 %v708
          %728 = vmatpush1.msra.mxu0 %v707
          %729 = vmatprep.subr.mxu0 %v710
          %730 = vmatpush1.msra.mxu0 %v709
          %731 = vmatprep.subr.mxu0 0.0
          %732 = vmatpush1.msra.mxu0 0.0
          %733 = vmatprep.subr.mxu0 0.0
          %734 = vmatpush1.msra.mxu0 0.0
          %735 = vmatprep.subr.mxu0 0.0
          %736 = vmatpush1.msra.mxu0 0.0
          %737 = vmatprep.subr.mxu0 0.0
          %738 = vmatpush1.msra.mxu0 0.0
          %739 = vmatprep.subr.mxu0 0.0
          %740 = vmatpush1.msra.mxu0 0.0
          %741 = vmatprep.subr.mxu0 0.0
          %742 = vmatpush1.msra.mxu0 0.0
          %743 = vmatprep.subr.mxu0 0.0
          %744 = vmatpush1.msra.mxu0 0.0
          %745 = vmatprep.subr.mxu0 0.0
          %746 = vmatpush1.msra.mxu0 0.0
          %747 = vmatprep.subr.mxu0 0.0
          %748 = vmatpush1.msra.mxu0 0.0
          %749 = vmatprep.subr.mxu0 0.0
          %750 = vmatpush1.msra.mxu0 0.0
          %751 = vmatprep.subr.mxu0 0.0
          %752 = vmatpush1.msra.mxu0 0.0
          %753 = vmatprep.subr.mxu0 0.0
          %754 = vmatpush1.msra.mxu0 0.0
          %755 = vmatprep.subr.mxu0 0.0
          %756 = vmatpush1.msra.mxu0 0.0
          %757 = vmatprep.subr.mxu0 0.0
          %758 = vmatpush1.msra.mxu0 0.0
          %759 = vmatprep.subr.mxu0 0.0
          %760 = vmatpush1.msra.mxu0 0.0
          %761 = vmatprep.subr.mxu0 0.0
          %762 = vmatpush1.msra.mxu0 0.0
          %763 = vmatprep.subr.mxu0 0.0
          %764 = vmatpush1.msra.mxu0 0.0
          %765 = vmatprep.subr.mxu0 0.0
          %766 = vmatpush1.msra.mxu0 0.0
          %767 = vmatprep.subr.mxu0 0.0
          %768 = vmatpush1.msra.mxu0 0.0
          %769 = vmatprep.subr.mxu0 0.0
          %770 = vmatpush1.msra.mxu0 0.0
          %771 = vmatprep.subr.mxu0 0.0
          %772 = vmatpush1.msra.mxu0 0.0
          %773 = vmatprep.subr.mxu0 0.0
          %774 = vmatpush1.msra.mxu0 0.0
          %775 = vmatprep.subr.mxu0 0.0
          %776 = vmatpush1.msra.mxu0 0.0
          %777 = vmatprep.subr.mxu0 0.0
          %778 = vmatpush1.msra.mxu0 0.0
          %779 = vmatprep.subr.mxu0 0.0
          %780 = vmatpush1.msra.mxu0 0.0
          %781 = vmatprep.subr.mxu0 0.0
          %782 = vmatpush1.msra.mxu0 0.0
          %783 = vmatprep.subr.mxu0 0.0
          %784 = vmatpush1.msra.mxu0 0.0
          %785 = vmatprep.subr.mxu0 0.0
          %786 = vmatpush1.msra.mxu0 0.0
          %787 = vmatprep.mubr.f32.mxu0 0.0
          %788 = vmatmul.mubr.f32.gmra.mrb[0].mxu0 %v712
          %v789 = vpop.f32.mrb[0].mxu0
          %v790 = vadd.f32 0.0, %v789
          %v791 = vpop.f32.mrb[0].mxu0
          %v792 = vadd.f32 0.0, %v791
          %793 = vmatprep.mubr.f32.mxu0 0.0
          %794 = vmatmul.mubr.f32.gmra.mrb[0].mxu0 %v715
          %v795 = vpop.f32.mrb[0].mxu0
          %v796 = vadd.f32 0.0, %v795
          %v797 = vpop.f32.mrb[0].mxu0
          %v798 = vadd.f32 0.0, %v797
          %799 = vmatprep.mubr.f32.mxu0 0.0
          %800 = vmatmul.mubr.f32.gmra.mrb[0].mxu0 %v718
          %v801 = vpop.f32.mrb[0].mxu0
          %v802 = vadd.f32 0.0, %v801
          %v803 = vpop.f32.mrb[0].mxu0
          %v804 = vadd.f32 0.0, %v803
          %805 = vmatprep.mubr.f32.mxu0 0.0
          %806 = vmatmul.mubr.f32.gmra.mrb[0].mxu0 %v721
          %v807 = vpop.f32.mrb[0].mxu0
          %v808 = vadd.f32 0.0, %v807
          %v809 = vpop.f32.mrb[0].mxu0
          %v810 = vadd.f32 0.0, %v809
          %811 = vdwg.mxu0
          %v812 = vld [vmem:[%s5] sm:$0xff]
          %v813 = vld [vmem:[%s5 + $0x8] sm:$0xff]
          %v814 = vld [vmem:[%s5 + $0x10] sm:$0xff]
          %v815 = vld [vmem:[%s5 + $0x18] sm:$0xff]
          %v816 = vld [vmem:[%s5 + $0x20] sm:$0xff]
          %v817 = vld [vmem:[%s5 + $0x28] sm:$0xff]
          %v818 = vld [vmem:[%s5 + $0x30] sm:$0xff]
          %v819 = vld [vmem:[%s5 + $0x38] sm:$0xff]
          %820 = vmatprep.subr.mxu0 %v813
          %821 = vmatpush1.msra.mxu0 %v812
          %822 = vmatprep.subr.mxu0 %v815
          %823 = vmatpush1.msra.mxu0 %v814
          %824 = vmatprep.subr.mxu0 %v817
          %825 = vmatpush1.msra.mxu0 %v816
          %826 = vmatprep.subr.mxu0 %v819
          %827 = vmatpush1.msra.mxu0 %v818
          %828 = vmatprep.subr.mxu0 0.0
          %829 = vmatpush1.msra.mxu0 0.0
          %830 = vmatprep.subr.mxu0 0.0
          %831 = vmatpush1.msra.mxu0 0.0
          %832 = vmatprep.subr.mxu0 0.0
          %833 = vmatpush1.msra.mxu0 0.0
          %834 = vmatprep.subr.mxu0 0.0
          %835 = vmatpush1.msra.mxu0 0.0
          %836 = vmatprep.subr.mxu0 0.0
          %837 = vmatpush1.msra.mxu0 0.0
          %838 = vmatprep.subr.mxu0 0.0
          %839 = vmatpush1.msra.mxu0 0.0
          %840 = vmatprep.subr.mxu0 0.0
          %841 = vmatpush1.msra.mxu0 0.0
          %842 = vmatprep.subr.mxu0 0.0
          %843 = vmatpush1.msra.mxu0 0.0
          %844 = vmatprep.subr.mxu0 0.0
          %845 = vmatpush1.msra.mxu0 0.0
          %846 = vmatprep.subr.mxu0 0.0
          %847 = vmatpush1.msra.mxu0 0.0
          %848 = vmatprep.subr.mxu0 0.0
          %849 = vmatpush1.msra.mxu0 0.0
          %850 = vmatprep.subr.mxu0 0.0
          %851 = vmatpush1.msra.mxu0 0.0
          %852 = vmatprep.subr.mxu0 0.0
          %853 = vmatpush1.msra.mxu0 0.0
          %854 = vmatprep.subr.mxu0 0.0
          %855 = vmatpush1.msra.mxu0 0.0
          %856 = vmatprep.subr.mxu0 0.0
          %857 = vmatpush1.msra.mxu0 0.0
          %858 = vmatprep.subr.mxu0 0.0
          %859 = vmatpush1.msra.mxu0 0.0
          %860 = vmatprep.subr.mxu0 0.0
          %861 = vmatpush1.msra.mxu0 0.0
          %862 = vmatprep.subr.mxu0 0.0
          %863 = vmatpush1.msra.mxu0 0.0
          %864 = vmatprep.subr.mxu0 0.0
          %865 = vmatpush1.msra.mxu0 0.0
          %866 = vmatprep.subr.mxu0 0.0
          %867 = vmatpush1.msra.mxu0 0.0
          %868 = vmatprep.subr.mxu0 0.0
          %869 = vmatpush1.msra.mxu0 0.0
          %870 = vmatprep.subr.mxu0 0.0
          %871 = vmatpush1.msra.mxu0 0.0
          %872 = vmatprep.subr.mxu0 0.0
          %873 = vmatpush1.msra.mxu0 0.0
          %874 = vmatprep.subr.mxu0 0.0
          %875 = vmatpush1.msra.mxu0 0.0
          %876 = vmatprep.subr.mxu0 0.0
          %877 = vmatpush1.msra.mxu0 0.0
          %878 = vmatprep.subr.mxu0 0.0
          %879 = vmatpush1.msra.mxu0 0.0
          %880 = vmatprep.subr.mxu0 0.0
          %881 = vmatpush1.msra.mxu0 0.0
          %882 = vmatprep.subr.mxu0 0.0
          %883 = vmatpush1.msra.mxu0 0.0
          %884 = vmatprep.mubr.f32.mxu0 0.0
          %885 = vmatmul.mubr.f32.gmra.mrb[0].mxu0 %v712
          %v886 = vpop.f32.mrb[0].mxu0
          %v887 = vadd.f32 0.0, %v886
          %v888 = vpop.f32.mrb[0].mxu0
          %v889 = vadd.f32 0.0, %v888
          %890 = vmatprep.mubr.f32.mxu0 0.0
          %891 = vmatmul.mubr.f32.gmra.mrb[0].mxu0 %v715
          %v892 = vpop.f32.mrb[0].mxu0
          %v893 = vadd.f32 0.0, %v892
          %v894 = vpop.f32.mrb[0].mxu0
          %v895 = vadd.f32 0.0, %v894
          %896 = vmatprep.mubr.f32.mxu0 0.0
          %897 = vmatmul.mubr.f32.gmra.mrb[0].mxu0 %v718
          %v898 = vpop.f32.mrb[0].mxu0
          %v899 = vadd.f32 0.0, %v898
          %v900 = vpop.f32.mrb[0].mxu0
          %v901 = vadd.f32 0.0, %v900
          %902 = vmatprep.mubr.f32.mxu0 0.0
          %903 = vmatmul.mubr.f32.gmra.mrb[0].mxu0 %v721
          %v904 = vpop.f32.mrb[0].mxu0
          %v905 = vadd.f32 0.0, %v904
          %v906 = vpop.f32.mrb[0].mxu0
          %v907 = vadd.f32 0.0, %v906
          %908 = vdwg.mxu0
          %v909 = vlaneseq
          %v910 = vshrl.u32 %v909, 7
          %v911 = vadd.s32 %v910, 8
          %v912 = vadd.s32 %v910, 16
          %v913 = vadd.s32 %v910, 24
          %v914 = vadd.s32 %v910, 32
          %v915 = vadd.s32 %v910, 40
          %v916 = vadd.s32 %v910, 48
          %v917 = vadd.s32 %v910, 56
          %v918 = vadd.s32 %v910, 64
          %v919 = vadd.s32 %v910, 72
          %v920 = vadd.s32 %v910, 80
          %v921 = vadd.s32 %v910, 88
          %v922 = vadd.s32 %v910, 96
          %v923 = vadd.s32 %v910, 104
          %v924 = vadd.s32 %v910, 112
          %v925 = vadd.s32 %v910, 120
          %v926 = vadd.s32 %v910, 128
          %v927 = vadd.s32 %v910, 136
          %v928 = vadd.s32 %v910, 144
          %v929 = vadd.s32 %v910, 152
          %v930 = vadd.s32 %v910, 160
          %v931 = vadd.s32 %v910, 168
          %v932 = vadd.s32 %v910, 176
          %v933 = vadd.s32 %v910, 184
          %v934 = vadd.s32 %v910, 192
          %v935 = vadd.s32 %v910, 200
          %v936 = vadd.s32 %v910, 208
          %v937 = vadd.s32 %v910, 216
          %v938 = vadd.s32 %v910, 224
          %v939 = vadd.s32 %v910, 232
          %v940 = vadd.s32 %v910, 240
          %v941 = vadd.s32 %v910, 248
          %v942 = vlaneseq
          %v943 = vand.u32 %v942, 127
          %v944 = vmul.u32 %v943, 64
          %vm945 = vcmp.ge.s32.totalorder %v910, %v944
          %vm946 = vcmp.ge.s32.totalorder %v911, %v944
          %vm947 = vcmp.ge.s32.totalorder %v912, %v944
          %vm948 = vcmp.ge.s32.totalorder %v913, %v944
          %vm949 = vcmp.ge.s32.totalorder %v914, %v944
          %vm950 = vcmp.ge.s32.totalorder %v915, %v944
          %vm951 = vcmp.ge.s32.totalorder %v916, %v944
          %vm952 = vcmp.ge.s32.totalorder %v917, %v944
          %vm953 = vcmp.ge.s32.totalorder %v918, %v944
          %vm954 = vcmp.ge.s32.totalorder %v919, %v944
          %vm955 = vcmp.ge.s32.totalorder %v920, %v944
          %vm956 = vcmp.ge.s32.totalorder %v921, %v944
          %vm957 = vcmp.ge.s32.totalorder %v922, %v944
          %vm958 = vcmp.ge.s32.totalorder %v923, %v944
          %vm959 = vcmp.ge.s32.totalorder %v924, %v944
          %vm960 = vcmp.ge.s32.totalorder %v925, %v944
          %vm961 = vcmp.ge.s32.totalorder %v926, %v944
          %vm962 = vcmp.ge.s32.totalorder %v927, %v944
          %vm963 = vcmp.ge.s32.totalorder %v928, %v944
          %vm964 = vcmp.ge.s32.totalorder %v929, %v944
          %vm965 = vcmp.ge.s32.totalorder %v930, %v944
          %vm966 = vcmp.ge.s32.totalorder %v931, %v944
          %vm967 = vcmp.ge.s32.totalorder %v932, %v944
          %vm968 = vcmp.ge.s32.totalorder %v933, %v944
          %vm969 = vcmp.ge.s32.totalorder %v934, %v944
          %vm970 = vcmp.ge.s32.totalorder %v935, %v944
          %vm971 = vcmp.ge.s32.totalorder %v936, %v944
          %vm972 = vcmp.ge.s32.totalorder %v937, %v944
          %vm973 = vcmp.ge.s32.totalorder %v938, %v944
          %vm974 = vcmp.ge.s32.totalorder %v939, %v944
          %vm975 = vcmp.ge.s32.totalorder %v940, %v944
          %vm976 = vcmp.ge.s32.totalorder %v941, %v944
          %v977 = vadd.s32 %v943, 1
          %v978 = vmul.u32 %v977, 64
          %vm979 = vcmp.lt.s32.totalorder %v910, %v978
          %vm980 = vcmp.lt.s32.totalorder %v911, %v978
          %vm981 = vcmp.lt.s32.totalorder %v912, %v978
          %vm982 = vcmp.lt.s32.totalorder %v913, %v978
          %vm983 = vcmp.lt.s32.totalorder %v914, %v978
          %vm984 = vcmp.lt.s32.totalorder %v915, %v978
          %vm985 = vcmp.lt.s32.totalorder %v916, %v978
          %vm986 = vcmp.lt.s32.totalorder %v917, %v978
          %vm987 = vcmp.lt.s32.totalorder %v918, %v978
          %vm988 = vcmp.lt.s32.totalorder %v919, %v978
          %vm989 = vcmp.lt.s32.totalorder %v920, %v978
          %vm990 = vcmp.lt.s32.totalorder %v921, %v978
          %vm991 = vcmp.lt.s32.totalorder %v922, %v978
          %vm992 = vcmp.lt.s32.totalorder %v923, %v978
          %vm993 = vcmp.lt.s32.totalorder %v924, %v978
          %vm994 = vcmp.lt.s32.totalorder %v925, %v978
          %vm995 = vcmp.lt.s32.totalorder %v926, %v978
          %vm996 = vcmp.lt.s32.totalorder %v927, %v978
          %vm997 = vcmp.lt.s32.totalorder %v928, %v978
          %vm998 = vcmp.lt.s32.totalorder %v929, %v978
          %vm999 = vcmp.lt.s32.totalorder %v930, %v978
          %vm1000 = vcmp.lt.s32.totalorder %v931, %v978
          %vm1001 = vcmp.lt.s32.totalorder %v932, %v978
          %vm1002 = vcmp.lt.s32.totalorder %v933, %v978
          %vm1003 = vcmp.lt.s32.totalorder %v934, %v978
          %vm1004 = vcmp.lt.s32.totalorder %v935, %v978
          %vm1005 = vcmp.lt.s32.totalorder %v936, %v978
          %vm1006 = vcmp.lt.s32.totalorder %v937, %v978
          %vm1007 = vcmp.lt.s32.totalorder %v938, %v978
          %vm1008 = vcmp.lt.s32.totalorder %v939, %v978
          %vm1009 = vcmp.lt.s32.totalorder %v940, %v978
          %vm1010 = vcmp.lt.s32.totalorder %v941, %v978
          %vm1011 = vmand %vm945, %vm979
          %vm1012 = vmand %vm946, %vm980
          %vm1013 = vmand %vm947, %vm981
          %vm1014 = vmand %vm948, %vm982
          %vm1015 = vmand %vm949, %vm983
          %vm1016 = vmand %vm950, %vm984
          %vm1017 = vmand %vm951, %vm985
          %vm1018 = vmand %vm952, %vm986
          %vm1019 = vmand %vm953, %vm987
          %vm1020 = vmand %vm954, %vm988
          %vm1021 = vmand %vm955, %vm989
          %vm1022 = vmand %vm956, %vm990
          %vm1023 = vmand %vm957, %vm991
          %vm1024 = vmand %vm958, %vm992
          %vm1025 = vmand %vm959, %vm993
          %vm1026 = vmand %vm960, %vm994
          %vm1027 = vmand %vm961, %vm995
          %vm1028 = vmand %vm962, %vm996
          %vm1029 = vmand %vm963, %vm997
          %vm1030 = vmand %vm964, %vm998
          %vm1031 = vmand %vm965, %vm999
          %vm1032 = vmand %vm966, %vm1000
          %vm1033 = vmand %vm967, %vm1001
          %vm1034 = vmand %vm968, %vm1002
          %vm1035 = vmand %vm969, %vm1003
          %vm1036 = vmand %vm970, %vm1004
          %vm1037 = vmand %vm971, %vm1005
          %vm1038 = vmand %vm972, %vm1006
          %vm1039 = vmand %vm973, %vm1007
          %vm1040 = vmand %vm974, %vm1008
          %vm1041 = vmand %vm975, %vm1009
          %vm1042 = vmand %vm976, %vm1010
          %v1043 = vsel %vm1011, 1, 0
          %v1044 = vsel %vm1012, 1, 0
          %v1045 = vsel %vm1013, 1, 0
          %v1046 = vsel %vm1014, 1, 0
          %v1047 = vsel %vm1015, 1, 0
          %v1048 = vsel %vm1016, 1, 0
          %v1049 = vsel %vm1017, 1, 0
          %v1050 = vsel %vm1018, 1, 0
          %v1051 = vsel %vm1019, 1, 0
          %v1052 = vsel %vm1020, 1, 0
          %v1053 = vsel %vm1021, 1, 0
          %v1054 = vsel %vm1022, 1, 0
          %v1055 = vsel %vm1023, 1, 0
          %v1056 = vsel %vm1024, 1, 0
          %v1057 = vsel %vm1025, 1, 0
          %v1058 = vsel %vm1026, 1, 0
          %v1059 = vsel %vm1027, 1, 0
          %v1060 = vsel %vm1028, 1, 0
          %v1061 = vsel %vm1029, 1, 0
          %v1062 = vsel %vm1030, 1, 0
          %v1063 = vsel %vm1031, 1, 0
          %v1064 = vsel %vm1032, 1, 0
          %v1065 = vsel %vm1033, 1, 0
          %v1066 = vsel %vm1034, 1, 0
          %v1067 = vsel %vm1035, 1, 0
          %v1068 = vsel %vm1036, 1, 0
          %v1069 = vsel %vm1037, 1, 0
          %v1070 = vsel %vm1038, 1, 0
          %v1071 = vsel %vm1039, 1, 0
          %v1072 = vsel %vm1040, 1, 0
          %v1073 = vsel %vm1041, 1, 0
          %v1074 = vsel %vm1042, 1, 0
          %v1075 = vcvt.s32.f32 %v1043
          %v1076 = vcvt.s32.f32 %v1044
          %v1077 = vcvt.s32.f32 %v1045
          %v1078 = vcvt.s32.f32 %v1046
          %v1079 = vcvt.s32.f32 %v1047
          %v1080 = vcvt.s32.f32 %v1048
          %v1081 = vcvt.s32.f32 %v1049
          %v1082 = vcvt.s32.f32 %v1050
          %v1083 = vcvt.s32.f32 %v1051
          %v1084 = vcvt.s32.f32 %v1052
          %v1085 = vcvt.s32.f32 %v1053
          %v1086 = vcvt.s32.f32 %v1054
          %v1087 = vcvt.s32.f32 %v1055
          %v1088 = vcvt.s32.f32 %v1056
          %v1089 = vcvt.s32.f32 %v1057
          %v1090 = vcvt.s32.f32 %v1058
          %v1091 = vcvt.s32.f32 %v1059
          %v1092 = vcvt.s32.f32 %v1060
          %v1093 = vcvt.s32.f32 %v1061
          %v1094 = vcvt.s32.f32 %v1062
          %v1095 = vcvt.s32.f32 %v1063
          %v1096 = vcvt.s32.f32 %v1064
          %v1097 = vcvt.s32.f32 %v1065
          %v1098 = vcvt.s32.f32 %v1066
          %v1099 = vcvt.s32.f32 %v1067
          %v1100 = vcvt.s32.f32 %v1068
          %v1101 = vcvt.s32.f32 %v1069
          %v1102 = vcvt.s32.f32 %v1070
          %v1103 = vcvt.s32.f32 %v1071
          %v1104 = vcvt.s32.f32 %v1072
          %v1105 = vcvt.s32.f32 %v1073
          %v1106 = vcvt.s32.f32 %v1074
          %v1107 = vadd.s32 %v943, 128
          %v1108 = vmul.u32 %v910, 64
          %vm1109 = vcmp.ge.s32.totalorder %v943, %v1108
          %vm1110 = vcmp.ge.s32.totalorder %v1107, %v1108
          %v1111 = vadd.s32 %v910, 1
          %v1112 = vmul.u32 %v1111, 64
          %vm1113 = vcmp.lt.s32.totalorder %v943, %v1112
          %vm1114 = vcmp.lt.s32.totalorder %v1107, %v1112
          %vm1115 = vmand %vm1109, %vm1113
          %vm1116 = vmand %vm1110, %vm1114
          %v1117 = vsel %vm1115, 1, 0
          %v1118 = vsel %vm1116, 1, 0
          %v1119 = vcvt.s32.f32 %v1117
          %v1120 = vcvt.s32.f32 %v1118
          %v1123 = vcombine.low %v699, %v701
          %v1125 = vunpack.c.l.s4 1966171168
          %v1126 = vunpack.c.0.s8 %v1125
          %v1127 = vlaneseq
          %v1128 = vshrl.u32 %v1127, 7
          %v1129 = vsub.s32 %v1126, %v1128
          %v1130 = vrot.slane %v1123, %v1129
          %v1131 = vcombine.high %v1130, %v1130
          %v1133 = vunpack.c.l.s4 1966171168
          %v1134 = vunpack.c.0.s8 %v1133
          %v1135 = vlaneseq
          %v1136 = vshrl.u32 %v1135, 7
          %v1137 = vsub.s32 %v1134, %v1136
          %v1138 = vrot.slane %v1130, %v1137
          %v1140 = vunpack.c.l.s4 1966171168
          %v1141 = vunpack.c.0.s8 %v1140
          %v1142 = vlaneseq
          %v1143 = vshrl.u32 %v1142, 7
          %v1144 = vsub.s32 %v1141, %v1143
          %v1145 = vrot.slane %v1131, %v1144
          %v1146 = vlaneseq
          %v1147 = vshrl.u32 %v1146, 7
          %v1148 = vsub.s32 0, %v1147
          %v1149 = vrot.slane %v1138, %v1148
          %v1150 = vlaneseq
          %v1151 = vshrl.u32 %v1150, 7
          %v1152 = vsub.s32 1, %v1151
          %v1153 = vrot.slane %v1138, %v1152
          %v1154 = vlaneseq
          %v1155 = vshrl.u32 %v1154, 7
          %v1156 = vsub.s32 0, %v1155
          %v1157 = vrot.slane %v1145, %v1156
          %v1158 = vlaneseq
          %v1159 = vshrl.u32 %v1158, 7
          %v1160 = vsub.s32 1, %v1159
          %v1161 = vrot.slane %v1145, %v1160
          %v1166 = vmul.f32 %v1149, %v790
          %v1167 = vmul.f32 %v1153, %v792
          %v1168 = vmul.f32 %v1149, %v796
          %v1169 = vmul.f32 %v1153, %v798
          %v1170 = vmul.f32 %v1157, %v802
          %v1171 = vmul.f32 %v1161, %v804
          %v1172 = vmul.f32 %v1157, %v808
          %v1173 = vmul.f32 %v1161, %v810
          %1174 = vmatprep.subr.mxu0 0.0
          %1175 = vmatpush1.msra.mxu0 %v1075
          %1176 = vmatprep.subr.mxu0 0.0
          %1177 = vmatpush1.msra.mxu0 %v1076
          %1178 = vmatprep.subr.mxu0 0.0
          %1179 = vmatpush1.msra.mxu0 %v1077
          %1180 = vmatprep.subr.mxu0 0.0
          %1181 = vmatpush1.msra.mxu0 %v1078
          %1182 = vmatprep.subr.mxu0 0.0
          %1183 = vmatpush1.msra.mxu0 %v1079
          %1184 = vmatprep.subr.mxu0 0.0
          %1185 = vmatpush1.msra.mxu0 %v1080
          %1186 = vmatprep.subr.mxu0 0.0
          %1187 = vmatpush1.msra.mxu0 %v1081
          %1188 = vmatprep.subr.mxu0 0.0
          %1189 = vmatpush1.msra.mxu0 %v1082
          %1190 = vmatprep.subr.mxu0 0.0
          %1191 = vmatpush1.msra.mxu0 %v1083
          %1192 = vmatprep.subr.mxu0 0.0
          %1193 = vmatpush1.msra.mxu0 %v1084
          %1194 = vmatprep.subr.mxu0 0.0
          %1195 = vmatpush1.msra.mxu0 %v1085
          %1196 = vmatprep.subr.mxu0 0.0
          %1197 = vmatpush1.msra.mxu0 %v1086
          %1198 = vmatprep.subr.mxu0 0.0
          %1199 = vmatpush1.msra.mxu0 %v1087
          %1200 = vmatprep.subr.mxu0 0.0
          %1201 = vmatpush1.msra.mxu0 %v1088
          %1202 = vmatprep.subr.mxu0 0.0
          %1203 = vmatpush1.msra.mxu0 %v1089
          %1204 = vmatprep.subr.mxu0 0.0
          %1205 = vmatpush1.msra.mxu0 %v1090
          %1206 = vmatprep.subr.mxu0 0.0
          %1207 = vmatpush1.msra.mxu0 %v1091
          %1208 = vmatprep.subr.mxu0 0.0
          %1209 = vmatpush1.msra.mxu0 %v1092
          %1210 = vmatprep.subr.mxu0 0.0
          %1211 = vmatpush1.msra.mxu0 %v1093
          %1212 = vmatprep.subr.mxu0 0.0
          %1213 = vmatpush1.msra.mxu0 %v1094
          %1214 = vmatprep.subr.mxu0 0.0
          %1215 = vmatpush1.msra.mxu0 %v1095
          %1216 = vmatprep.subr.mxu0 0.0
          %1217 = vmatpush1.msra.mxu0 %v1096
          %1218 = vmatprep.subr.mxu0 0.0
          %1219 = vmatpush1.msra.mxu0 %v1097
          %1220 = vmatprep.subr.mxu0 0.0
          %1221 = vmatpush1.msra.mxu0 %v1098
          %1222 = vmatprep.subr.mxu0 0.0
          %1223 = vmatpush1.msra.mxu0 %v1099
          %1224 = vmatprep.subr.mxu0 0.0
          %1225 = vmatpush1.msra.mxu0 %v1100
          %1226 = vmatprep.subr.mxu0 0.0
          %1227 = vmatpush1.msra.mxu0 %v1101
          %1228 = vmatprep.subr.mxu0 0.0
          %1229 = vmatpush1.msra.mxu0 %v1102
          %1230 = vmatprep.subr.mxu0 0.0
          %1231 = vmatpush1.msra.mxu0 %v1103
          %1232 = vmatprep.subr.mxu0 0.0
          %1233 = vmatpush1.msra.mxu0 %v1104
          %1234 = vmatprep.subr.mxu0 0.0
          %1235 = vmatpush1.msra.mxu0 %v1105
          %1236 = vmatprep.subr.mxu0 0.0
          %1237 = vmatpush1.msra.mxu0 %v1106
          %1238 = vmatprep.mubr.f32.mxu0 %v1167
          %1239 = vmatmul.mubr.f32.gmra.mrb[0].mxu0 %v1166
          %v1240 = vpop.f32.mrb[0].mxu0
          %v1241 = vadd.f32 0.0, %v1240
          %v1242 = vpop.f32.mrb[0].mxu0
          %1243 = vmatprep.mubr.f32.mxu0 %v1169
          %1244 = vmatmul.mubr.f32.gmra.mrb[0].mxu0 %v1168
          %v1245 = vpop.f32.mrb[0].mxu0
          %v1246 = vadd.f32 0.0, %v1245
          %v1247 = vpop.f32.mrb[0].mxu0
          %1248 = vmatprep.mubr.f32.mxu0 %v1171
          %1249 = vmatmul.mubr.f32.gmra.mrb[0].mxu0 %v1170
          %v1250 = vpop.f32.mrb[0].mxu0
          %v1251 = vadd.f32 0.0, %v1250
          %v1252 = vpop.f32.mrb[0].mxu0
          %1253 = vmatprep.mubr.f32.mxu0 %v1173
          %1254 = vmatmul.mubr.f32.gmra.mrb[0].mxu0 %v1172
          %v1255 = vpop.f32.mrb[0].mxu0
          %v1256 = vadd.f32 0.0, %v1255
          %v1257 = vpop.f32.mrb[0].mxu0
          %1258 = vdwg.mxu0
          %v1259 = vmul.f32 %v1241, 0.17677669
          %v1260 = vmul.f32 %v1246, 0.17677669
          %v1261 = vmul.f32 %v1251, 0.17677669
          %v1262 = vmul.f32 %v1256, 0.17677669
          %vm1263 = vcmp.lt.f32.partialorder %v517, -10.0
          %vm1264 = vcmp.lt.f32.partialorder %v518, -10.0
          %vm1265 = vcmp.lt.f32.partialorder %v519, -10.0
          %vm1266 = vcmp.lt.f32.partialorder %v520, -10.0
          %v1267 = vsel %vm1263, 1, 0
          %v1268 = vsel %vm1264, 1, 0
          %v1269 = vsel %vm1265, 1, 0
          %v1270 = vsel %vm1266, 1, 0
          %1271 = vset.pattern.permute.xlu0 0
          %1272 = vperm.xlu0 %1271, %v1267
          %v1273 = vpop.permute.xlu0 %1272
          %1274 = vset.pattern.permute.xlu0 0
          %1275 = vperm.xlu0 %1274, %v1268
          %v1276 = vpop.permute.xlu0 %1275
          %1277 = vset.pattern.permute.xlu0 0
          %1278 = vperm.xlu0 %1277, %v1269
          %v1279 = vpop.permute.xlu0 %1278
          %1280 = vset.pattern.permute.xlu0 0
          %1281 = vperm.xlu0 %1280, %v1270
          %v1282 = vpop.permute.xlu0 %1281
          %vm1283 = vcmp.eq.s32.totalorder %v1273, 1
          %vm1284 = vcmp.eq.s32.totalorder %v1276, 1
          %vm1285 = vcmp.eq.s32.totalorder %v1279, 1
          %vm1286 = vcmp.eq.s32.totalorder %v1282, 1
          %v1287 = vsel %vm1283, -inf, %v1259
          %v1288 = vsel %vm1284, -inf, %v1260
          %v1289 = vsel %vm1285, -inf, %v1261
          %v1290 = vsel %vm1286, -inf, %v1262
          %vm1291 = vcmask 31744
          %v1292 = vsel %vm1291, %v1287, -inf
          %v1293 = vsel %vm1291, %v1288, -inf
          %v1294 = vmax.f32 %v1292, %v1293
          %v1295 = vrot.slane %v1294, 4
          %v1296 = vmax.f32 %v1294, %v1295
          %v1297 = vrot.slane %v1296, 2
          %v1298 = vmax.f32 %v1296, %v1297
          %v1299 = vrot.slane %v1298, 1
          %v1300 = vmax.f32 %v1298, %v1299
          %v1301 = vsel %vm1291, %v1289, -inf
          %v1302 = vsel %vm1291, %v1290, -inf
          %v1303 = vmax.f32 %v1301, %v1302
          %v1304 = vrot.slane %v1303, 4
          %v1305 = vmax.f32 %v1303, %v1304
          %v1306 = vrot.slane %v1305, 2
          %v1307 = vmax.f32 %v1305, %v1306
          %v1308 = vrot.slane %v1307, 1
          %v1309 = vmax.f32 %v1307, %v1308
          %v1310 = vsub.f32 %v1287, %v1300
          %v1311 = vsub.f32 %v1288, %v1300
          %v1312 = vsub.f32 %v1289, %v1309
          %v1313 = vsub.f32 %v1290, %v1309
          %v1314 = vmul.f32 %v1310, 1.442695
          %v1315 = vpow.pop %v1314
          %v1316 = vmul.f32 %v1311, 1.442695
          %v1317 = vpow.pop %v1316
          %v1318 = vmul.f32 %v1312, 1.442695
          %v1319 = vpow.pop %v1318
          %v1320 = vmul.f32 %v1313, 1.442695
          %v1321 = vpow.pop %v1320
          %v1322 = vsel %vm1291, %v1315, 0.0
          %v1323 = vsel %vm1291, %v1317, 0.0
          %v1324 = vadd.f32 %v1322, %v1323
          %v1325 = vrot.slane %v1324, 4
          %v1326 = vadd.f32 %v1324, %v1325
          %v1327 = vrot.slane %v1326, 2
          %v1328 = vadd.f32 %v1326, %v1327
          %v1329 = vrot.slane %v1328, 1
          %v1330 = vadd.f32 %v1328, %v1329
          %v1331 = vsel %vm1291, %v1319, 0.0
          %v1332 = vsel %vm1291, %v1321, 0.0
          %v1333 = vadd.f32 %v1331, %v1332
          %v1334 = vrot.slane %v1333, 4
          %v1335 = vadd.f32 %v1333, %v1334
          %v1336 = vrot.slane %v1335, 2
          %v1337 = vadd.f32 %v1335, %v1336
          %v1338 = vrot.slane %v1337, 1
          %v1339 = vadd.f32 %v1337, %v1338
          %v1340 = vrcp.pop %v1330
          %v1341 = vrcp.pop %v1339
          %v1342 = vmul.f32 %v1315, %v1340
          %v1343 = vmul.f32 %v1317, %v1340
          %v1344 = vmul.f32 %v1319, %v1341
          %v1345 = vmul.f32 %v1321, %v1341
          %v1347 = vsel %vm1291, %v1342, 0
          %v1350 = vsel %vm1291, %v1343, 0
          %v1353 = vsel %vm1291, %v1344, 0
          %v1356 = vsel %vm1291, %v1345, 0
          %vm1358 = vcmask 1043456
          %v1360 = vsel %vm1358, %v1119, 0
          %v1363 = vsel %vm1358, %v1120, 0
          %1365 = vmatprep.subr.mxu0 %v1363
          %1366 = vmatpush1.msra.mxu0 %v1360
          %1367 = vmatprep.subr.mxu0 0.0
          %1368 = vmatpush1.msra.mxu0 0.0
          %1369 = vmatprep.subr.mxu0 0.0
          %1370 = vmatpush1.msra.mxu0 0.0
          %1371 = vmatprep.subr.mxu0 0.0
          %1372 = vmatpush1.msra.mxu0 0.0
          %1373 = vmatprep.subr.mxu0 0.0
          %1374 = vmatpush1.msra.mxu0 0.0
          %1375 = vmatprep.subr.mxu0 0.0
          %1376 = vmatpush1.msra.mxu0 0.0
          %1377 = vmatprep.subr.mxu0 0.0
          %1378 = vmatpush1.msra.mxu0 0.0
          %1379 = vmatprep.subr.mxu0 0.0
          %1380 = vmatpush1.msra.mxu0 0.0
          %1381 = vmatprep.subr.mxu0 0.0
          %1382 = vmatpush1.msra.mxu0 0.0
          %1383 = vmatprep.subr.mxu0 0.0
          %1384 = vmatpush1.msra.mxu0 0.0
          %1385 = vmatprep.subr.mxu0 0.0
          %1386 = vmatpush1.msra.mxu0 0.0
          %1387 = vmatprep.subr.mxu0 0.0
          %1388 = vmatpush1.msra.mxu0 0.0
          %1389 = vmatprep.subr.mxu0 0.0
          %1390 = vmatpush1.msra.mxu0 0.0
          %1391 = vmatprep.subr.mxu0 0.0
          %1392 = vmatpush1.msra.mxu0 0.0
          %1393 = vmatprep.subr.mxu0 0.0
          %1394 = vmatpush1.msra.mxu0 0.0
          %1395 = vmatprep.subr.mxu0 0.0
          %1396 = vmatpush1.msra.mxu0 0.0
          %1397 = vmatprep.subr.mxu0 0.0
          %1398 = vmatpush1.msra.mxu0 0.0
          %1399 = vmatprep.subr.mxu0 0.0
          %1400 = vmatpush1.msra.mxu0 0.0
          %1401 = vmatprep.subr.mxu0 0.0
          %1402 = vmatpush1.msra.mxu0 0.0
          %1403 = vmatprep.subr.mxu0 0.0
          %1404 = vmatpush1.msra.mxu0 0.0
          %1405 = vmatprep.subr.mxu0 0.0
          %1406 = vmatpush1.msra.mxu0 0.0
          %1407 = vmatprep.subr.mxu0 0.0
          %1408 = vmatpush1.msra.mxu0 0.0
          %1409 = vmatprep.subr.mxu0 0.0
          %1410 = vmatpush1.msra.mxu0 0.0
          %1411 = vmatprep.subr.mxu0 0.0
          %1412 = vmatpush1.msra.mxu0 0.0
          %1413 = vmatprep.subr.mxu0 0.0
          %1414 = vmatpush1.msra.mxu0 0.0
          %1415 = vmatprep.subr.mxu0 0.0
          %1416 = vmatpush1.msra.mxu0 0.0
          %1417 = vmatprep.subr.mxu0 0.0
          %1418 = vmatpush1.msra.mxu0 0.0
          %1419 = vmatprep.subr.mxu0 0.0
          %1420 = vmatpush1.msra.mxu0 0.0
          %1421 = vmatprep.subr.mxu0 0.0
          %1422 = vmatpush1.msra.mxu0 0.0
          %1423 = vmatprep.subr.mxu0 0.0
          %1424 = vmatpush1.msra.mxu0 0.0
          %1425 = vmatprep.subr.mxu0 0.0
          %1426 = vmatpush1.msra.mxu0 0.0
          %1427 = vmatprep.subr.mxu0 0.0
          %1428 = vmatpush1.msra.mxu0 0.0
          %1429 = vmatprep.mubr.f32.mxu0 0.0
          %1430 = vmatmul.mubr.f32.gmra.mrb[0].mxu0 %v1347
          %v1431 = vpop.f32.mrb[0].mxu0
          %v1432 = vadd.f32 0.0, %v1431
          %v1433 = vpop.f32.mrb[0].mxu0
          %v1434 = vadd.f32 0.0, %v1433
          %1435 = vmatprep.mubr.f32.mxu0 0.0
          %1436 = vmatmul.mubr.f32.gmra.mrb[0].mxu0 %v1350
          %v1437 = vpop.f32.mrb[0].mxu0
          %v1438 = vadd.f32 0.0, %v1437
          %v1439 = vpop.f32.mrb[0].mxu0
          %v1440 = vadd.f32 0.0, %v1439
          %1441 = vmatprep.mubr.f32.mxu0 0.0
          %1442 = vmatmul.mubr.f32.gmra.mrb[0].mxu0 %v1353
          %v1443 = vpop.f32.mrb[0].mxu0
          %v1444 = vadd.f32 0.0, %v1443
          %v1445 = vpop.f32.mrb[0].mxu0
          %v1446 = vadd.f32 0.0, %v1445
          %1447 = vmatprep.mubr.f32.mxu0 0.0
          %1448 = vmatmul.mubr.f32.gmra.mrb[0].mxu0 %v1356
          %v1449 = vpop.f32.mrb[0].mxu0
          %v1450 = vadd.f32 0.0, %v1449
          %v1451 = vpop.f32.mrb[0].mxu0
          %v1452 = vadd.f32 0.0, %v1451
          %1453 = vdwg.mxu0
          %v1454 = vmul.f32 %v1432, %v887
          %v1455 = vmul.f32 %v1434, %v889
          %v1456 = vmul.f32 %v1438, %v893
          %v1457 = vmul.f32 %v1440, %v895
          %v1458 = vmul.f32 %v1444, %v899
          %v1459 = vmul.f32 %v1446, %v901
          %v1460 = vmul.f32 %v1450, %v905
          %v1461 = vmul.f32 %v1452, %v907
          %v1462 = vadd.f32 %v1454, %v1456
          %v1463 = vrot.slane %v1462, 4
          %v1464 = vadd.f32 %v1462, %v1463
          %v1465 = vrot.slane %v1464, 2
          %v1466 = vadd.f32 %v1464, %v1465
          %v1467 = vrot.slane %v1466, 1
          %v1468 = vadd.f32 %v1466, %v1467
          %v1469 = vadd.f32 %v1455, %v1457
          %v1470 = vrot.slane %v1469, 4
          %v1471 = vadd.f32 %v1469, %v1470
          %v1472 = vrot.slane %v1471, 2
          %v1473 = vadd.f32 %v1471, %v1472
          %v1474 = vrot.slane %v1473, 1
          %v1475 = vadd.f32 %v1473, %v1474
          %v1476 = vadd.f32 %v1458, %v1460
          %v1477 = vrot.slane %v1476, 4
          %v1478 = vadd.f32 %v1476, %v1477
          %v1479 = vrot.slane %v1478, 2
          %v1480 = vadd.f32 %v1478, %v1479
          %v1481 = vrot.slane %v1480, 1
          %v1482 = vadd.f32 %v1480, %v1481
          %v1483 = vadd.f32 %v1459, %v1461
          %v1484 = vrot.slane %v1483, 4
          %v1485 = vadd.f32 %v1483, %v1484
          %v1486 = vrot.slane %v1485, 2
          %v1487 = vadd.f32 %v1485, %v1486
          %v1488 = vrot.slane %v1487, 1
          %v1489 = vadd.f32 %v1487, %v1488
          %v1490 = vld [vmem:[%s6] sm:$0xff]
          %v1491 = vld [vmem:[%s6 + $0x8] sm:$0xff]
          %v1492 = vld [vmem:[%s6 + $0x10] sm:$0xff]
          %v1493 = vld [vmem:[%s6 + $0x18] sm:$0xff]
          %v1494 = vld [vmem:[%s6 + $0x20] sm:$0xff]
          %v1495 = vld [vmem:[%s6 + $0x28] sm:$0xff]
          %v1496 = vld [vmem:[%s6 + $0x30] sm:$0xff]
          %v1497 = vld [vmem:[%s6 + $0x38] sm:$0xff]
          %v1498 = vld [vmem:[%s6 + $0x40] sm:$0xff]
          %v1499 = vld [vmem:[%s6 + $0x48] sm:$0xff]
          %v1500 = vld [vmem:[%s6 + $0x50] sm:$0xff]
          %v1501 = vld [vmem:[%s6 + $0x58] sm:$0xff]
          %v1502 = vld [vmem:[%s6 + $0x60] sm:$0xff]
          %v1503 = vld [vmem:[%s6 + $0x68] sm:$0xff]
          %v1504 = vld [vmem:[%s6 + $0x70] sm:$0xff]
          %v1505 = vld [vmem:[%s6 + $0x78] sm:$0xff]
          %v1506 = vld [vmem:[%s6 + $0x80] sm:$0xff]
          %v1507 = vld [vmem:[%s6 + $0x88] sm:$0xff]
          %v1508 = vld [vmem:[%s6 + $0x90] sm:$0xff]
          %v1509 = vld [vmem:[%s6 + $0x98] sm:$0xff]
          %v1510 = vld [vmem:[%s6 + $0xa0] sm:$0xff]
          %v1511 = vld [vmem:[%s6 + $0xa8] sm:$0xff]
          %v1512 = vld [vmem:[%s6 + $0xb0] sm:$0xff]
          %v1513 = vld [vmem:[%s6 + $0xb8] sm:$0xff]
          %v1514 = vld [vmem:[%s6 + $0xc0] sm:$0xff]
          %v1515 = vld [vmem:[%s6 + $0xc8] sm:$0xff]
          %v1516 = vld [vmem:[%s6 + $0xd0] sm:$0xff]
          %v1517 = vld [vmem:[%s6 + $0xd8] sm:$0xff]
          %v1518 = vld [vmem:[%s6 + $0xe0] sm:$0xff]
          %v1519 = vld [vmem:[%s6 + $0xe8] sm:$0xff]
          %v1520 = vld [vmem:[%s6 + $0xf0] sm:$0xff]
          %v1521 = vld [vmem:[%s6 + $0xf8] sm:$0xff]
          %v1522 = vld [vmem:[%s7] sm:$0x1]
          %v1524 = vlaneseq
          %v1525 = vshrl.u32 %v1524, 7
          %v1526 = vsub.s32 0, %v1525
          %v1527 = vrot.slane %v1522, %v1526
          %v1533 = vsel %vm504, %v1482, %v1468
          %v1534 = vsel %vm504, %v1489, %v1475
          %1537 = vmatprep.subr.mxu0 0.0
          %1538 = vmatpush1.msra.mxu0 %v1490
          %1539 = vmatprep.subr.mxu0 0.0
          %1540 = vmatpush1.msra.mxu0 %v1491
          %1541 = vmatprep.subr.mxu0 0.0
          %1542 = vmatpush1.msra.mxu0 %v1492
          %1543 = vmatprep.subr.mxu0 0.0
          %1544 = vmatpush1.msra.mxu0 %v1493
          %1545 = vmatprep.subr.mxu0 0.0
          %1546 = vmatpush1.msra.mxu0 %v1494
          %1547 = vmatprep.subr.mxu0 0.0
          %1548 = vmatpush1.msra.mxu0 %v1495
          %1549 = vmatprep.subr.mxu0 0.0
          %1550 = vmatpush1.msra.mxu0 %v1496
          %1551 = vmatprep.subr.mxu0 0.0
          %1552 = vmatpush1.msra.mxu0 %v1497
          %1553 = vmatprep.subr.mxu0 0.0
          %1554 = vmatpush1.msra.mxu0 %v1498
          %1555 = vmatprep.subr.mxu0 0.0
          %1556 = vmatpush1.msra.mxu0 %v1499
          %1557 = vmatprep.subr.mxu0 0.0
          %1558 = vmatpush1.msra.mxu0 %v1500
          %1559 = vmatprep.subr.mxu0 0.0
          %1560 = vmatpush1.msra.mxu0 %v1501
          %1561 = vmatprep.subr.mxu0 0.0
          %1562 = vmatpush1.msra.mxu0 %v1502
          %1563 = vmatprep.subr.mxu0 0.0
          %1564 = vmatpush1.msra.mxu0 %v1503
          %1565 = vmatprep.subr.mxu0 0.0
          %1566 = vmatpush1.msra.mxu0 %v1504
          %1567 = vmatprep.subr.mxu0 0.0
          %1568 = vmatpush1.msra.mxu0 %v1505
          %1569 = vmatprep.subr.mxu0 0.0
          %1570 = vmatpush1.msra.mxu0 %v1506
          %1571 = vmatprep.subr.mxu0 0.0
          %1572 = vmatpush1.msra.mxu0 %v1507
          %1573 = vmatprep.subr.mxu0 0.0
          %1574 = vmatpush1.msra.mxu0 %v1508
          %1575 = vmatprep.subr.mxu0 0.0
          %1576 = vmatpush1.msra.mxu0 %v1509
          %1577 = vmatprep.subr.mxu0 0.0
          %1578 = vmatpush1.msra.mxu0 %v1510
          %1579 = vmatprep.subr.mxu0 0.0
          %1580 = vmatpush1.msra.mxu0 %v1511
          %1581 = vmatprep.subr.mxu0 0.0
          %1582 = vmatpush1.msra.mxu0 %v1512
          %1583 = vmatprep.subr.mxu0 0.0
          %1584 = vmatpush1.msra.mxu0 %v1513
          %1585 = vmatprep.subr.mxu0 0.0
          %1586 = vmatpush1.msra.mxu0 %v1514
          %1587 = vmatprep.subr.mxu0 0.0
          %1588 = vmatpush1.msra.mxu0 %v1515
          %1589 = vmatprep.subr.mxu0 0.0
          %1590 = vmatpush1.msra.mxu0 %v1516
          %1591 = vmatprep.subr.mxu0 0.0
          %1592 = vmatpush1.msra.mxu0 %v1517
          %1593 = vmatprep.subr.mxu0 0.0
          %1594 = vmatpush1.msra.mxu0 %v1518
          %1595 = vmatprep.subr.mxu0 0.0
          %1596 = vmatpush1.msra.mxu0 %v1519
          %1597 = vmatprep.subr.mxu0 0.0
          %1598 = vmatpush1.msra.mxu0 %v1520
          %1599 = vmatprep.subr.mxu0 0.0
          %1600 = vmatpush1.msra.mxu0 %v1521
          %1601 = vmatprep.mubr.f32.mxu0 %v1534
          %1602 = vmatmul.mubr.f32.gmra.mrb[0].mxu0 %v1533
          %v1603 = vpop.f32.mrb[0].mxu0
          %v1604 = vadd.f32 %v1527, %v1603
          %v1605 = vpop.f32.mrb[0].mxu0
          %1606 = vdwg.mxu0
          %vm1607 = vcmask 254976
          %1608 = vst.msk [vmem:[#allocation3] sm:$0x3] %vm1607, %v1604
        $region98: #{tpu_custom_call.1} parent=85 // pred_fallthru
          _
        // Predicated region
        $region99: #{tpu_custom_call.1} parent=85 // pred_check
          %p1609 = pneg %p238
        $region100: #{tpu_custom_call.1} parent=85 // pred_check_branch
          %1611 = sbr.rel (%p1609) target = $region102
        $region101: #{tpu_custom_call.1} parent=85 // pred_region
          %s1613 = ssub.s32 32, 32
          %1614 = vsyncadd [#allocation4], %s1613
          %s1615 = smul.addr %s27, 32
          %s1616 = scalar_lea.hbm %s8, %s1615
          %s1618 = sshll.u32 [#allocation3], 4
          %s1619 = int_to_ptr.vmem [resolvable:$true] %s1618
          %1621 = dma.vmem_to_hbm [thread:$0]  %s1619, 32, %s1616, [#allocation4]
        $region102: #{tpu_custom_call.1} parent=85 // pred_fallthru
          _
        // Predicated region
        $region103: #{tpu_custom_call.1} parent=85 // pred_check
          %p1622 = pneg %p264
        $region104: #{tpu_custom_call.1} parent=85 // pred_check_branch
          %1624 = sbr.rel (%p1622) target = $region106
        $region105: #{tpu_custom_call.1} parent=85 // pred_region
          %s1626 = ssub.s32 32, 32
          %1627 = vsyncadd [#allocation6], %s1626
          %s1628 = smul.addr %s27, 32
          %s1629 = scalar_lea.hbm %s9, %s1628
          %s1631 = sshll.u32 [#allocation5], 4
          %s1632 = int_to_ptr.vmem [resolvable:$true] %s1631
          %1634 = dma.vmem_to_hbm [thread:$0]  %s1632, 32, %s1629, [#allocation6]
        $region106: #{tpu_custom_call.1} parent=85 // pred_fallthru
          _
        // Predicated region
        $region107: #{tpu_custom_call.1} parent=85 // pred_check
          %p1635 = pneg %p238
        $region108: #{tpu_custom_call.1} parent=85 // pred_check_branch
          %1637 = sbr.rel (%p1635) target = $region110
        $region109: #{tpu_custom_call.1} parent=85 // pred_region
          %1638 = dma.done [#allocation4], 32
        $region110: #{tpu_custom_call.1} parent=85 // pred_fallthru
          _
        // Predicated region
        $region111: #{tpu_custom_call.1} parent=85 // pred_check
          %p1639 = pneg %p264
        $region112: #{tpu_custom_call.1} parent=85 // pred_check_branch
          %1641 = sbr.rel (%p1639) target = $region114
        $region113: #{tpu_custom_call.1} parent=85 // pred_region
          %1642 = dma.done [#allocation6], 32
        $region114: #{tpu_custom_call.1} parent=85 // pred_fallthru
          _
      $region86: #{tpu_custom_call.1} parent=5 // pred_fallthru
        _
      %p1643 = scmp.le.s32.totalorder 2, %s18
      // Predicated region
      $region115: #{tpu_custom_call.1} parent=5 // pred_check
        %p1644 = pneg %p1643
      $region116: #{tpu_custom_call.1} parent=5 // pred_check_branch
        %1646 = sbr.rel (%p1644) target = $region118
      $region117: #{tpu_custom_call.1} parent=5 // pred_region
        %s1647 = ssub.s32 %s18, 2
      $region118: #{tpu_custom_call.1} parent=5 // pred_fallthru
        _
    $region6: #{tpu_custom_call.1} parent=1 // loop_footer
      %s22 = sadd.s32 1, %s18
    $region7: #{tpu_custom_call.1} parent=1 // loop_footer_branch
      %17 = sbr.rel target = $region3
    $region8: #{tpu_custom_call.1} parent=1 // loop_exit
      _
    %1648 = vsyncpa [#allocation4], 1
    %s1649 = scalar_lea.sflag [#allocation4], 1
    %1650 = vsyncpa %s1649, 1
    %1651 = vsyncpa [#allocation6], 1

</llo_original>
